<compile_context>
chip_gen: v6e
topology: v6e:2x2x1
jax: 0.10.0
libtpu: 0.0.40
codegen_flags: <defaults>
</compile_context>

<pallas_src>
import math

import jax
import jax.numpy as jnp
from jax.experimental import pallas as pl
from jax.experimental.pallas import tpu as pltpu


BN_EPS = 1e-5
LEAKY_SLOPE = 0.01
MAX_TILE_B = 512


def _round_up(n, m):
    return ((n + m - 1) // m) * m


def _leaky(v):
    return jnp.where(v >= 0, v, LEAKY_SLOPE * v)


def _choose_tile_b(B):
    """Batch tile: >=16 rows (bf16 sublane packing), up to 512 rows, and at
    large batch keep >=2 grid steps so v7x's 2 TensorCores both get work."""
    B16 = _round_up(max(B, 16), 16)
    if B16 <= MAX_TILE_B:
        return B16                      # single step; >=256 rows fill the MXU
    for t in (512, 384, 256):           # largest tile with <= half-tile padding
        if _round_up(B16, t) - B16 <= t // 2:
            return t
    return 256


def _default_act_dtype():
    """bf16 element-wise math on chips with a bf16 VPU (v6e/v7x); f32 on v5e
    and older (no bf16 VPU -> bf16 element-wise would be decomposed)."""
    try:
        kind = jax.devices()[0].device_kind.lower()
    except Exception:
        return jnp.bfloat16
    if any(t in kind for t in ("v5 lite", "v5lite", "v5e", "v4", "v3", "v2")):
        return jnp.float32
    return jnp.bfloat16


def _bias_layout(nh, nclasses, P, nx):
    """Offsets (128-lane aligned) and total width of the packed bias row.
    Order: b_in, qb2, cb2, cb3, b_head, pb1, pb2, pb3."""
    sizes = (2 * nh, nh, nh, nclasses, P, nh, nh, nx)
    offs, total = [], 0
    for s in sizes:
        offs.append(total)
        total += _round_up(s, 128)
    return tuple(offs), total, sizes


# --------------------------------------------------------------------------
# Kernel
# --------------------------------------------------------------------------
def _make_kernel(nh, nz, act_dtype, bias_offs):
    o_bin, o_qb2, o_cb2, o_cb3, o_bh, o_pb1, o_pb2, o_pb3 = bias_offs

    def kernel(x_ref, eps_ref, w_in, qw2, cw2, cw3, wh_h, wh_y,
               pw1, pw2, pw3, bias_ref, head_out, rec_out):
        bf16 = jnp.bfloat16
        nclasses = cw3.shape[1]
        P = wh_h.shape[1]
        nx = pw3.shape[1]

        def mm(a, w_ref):
            # MXU matmul: bf16 operands, f32 accumulation.
            return jnp.dot(a.astype(bf16), w_ref[...],
                           preferred_element_type=jnp.float32)

        def bias(off, size):
            return bias_ref[:, off:off + size]          # static, 128-aligned

        x = x_ref[...]

        # Fused first layer: [encoder Q | clusterer C], BatchNorm pre-folded.
        hg = mm(x, w_in) + bias(o_bin, 2 * nh)           # (TB, 2*nh) f32
        h = _leaky(hg[:, :nh].astype(act_dtype))         # Q: Lin->BN->LeakyReLU
        g = hg[:, nh:].astype(act_dtype)                 # C: Lin->BN (no act)

        # Second layers (BN folded); element-wise math in act_dtype.
        h = _leaky((mm(h, qw2) + bias(o_qb2, nh)).astype(act_dtype))
        g = _leaky((mm(g, cw2) + bias(o_cb2, nh)).astype(act_dtype))

        # Clusterer softmax head (f32 numerics, approx reciprocal on EUP).
        logits = mm(g, cw3) + bias(o_cb3, nclasses)
        m = jnp.max(logits, axis=-1, keepdims=True)
        e = jnp.exp(logits - m)
        y = e * pl.reciprocal(jnp.sum(e, axis=-1, keepdims=True), approx=True)

        # Lane-dense head slab: cols [0:nz)=mu, [nz:2nz)=logvar, [2nz:3nz)=c_z.
        head = mm(h, wh_h) + mm(y, wh_y) + bias(o_bh, P)  # (TB, P) f32
        head_out[...] = head

        mu = head[:, :nz]
        lv = head[:, nz:2 * nz]

        # Reparameterization.
        z = mu + jnp.exp(0.5 * lv) * eps_ref[...]

        # Decoder P.
        d = _leaky((mm(z, pw1) + bias(o_pb1, nh)).astype(act_dtype))
        d = _leaky((mm(d, pw2) + bias(o_pb2, nh)).astype(act_dtype))
        r = mm(d, pw3) + bias(o_pb3, nx)
        rec = pl.reciprocal(1.0 + jnp.exp(-r), approx=True)   # sigmoid
        rec_out[...] = rec.astype(rec_out.dtype)              # bf16 writeback

    return kernel


# --------------------------------------------------------------------------
# Wrapper
# --------------------------------------------------------------------------
def ae3_forward(x_img, eps, prep, act_dtype=None):
    """x_img: (B, C, H, W) f32, eps: (B, nz) f32, prep: prepared params."""
    if act_dtype is None:
        act_dtype = _default_act_dtype()

    B = x_img.shape[0]
    nx = math.prod(x_img.shape[1:])
    x = x_img.reshape(B, nx)                 # nn.Flatten (plain-JAX glue)
    nz = eps.shape[-1]
    nh = prep["qw2"].shape[0]
    nclasses = prep["cw3"].shape[1]
    P = prep["wh_h"].shape[1]
    bias_offs = prep["bias_offsets"]

    tile_b = _choose_tile_b(B)
    Bp = _round_up(B, tile_b)
    if Bp != B:
        x_p = jnp.pad(x, ((0, Bp - B), (0, 0)))
        eps_p = jnp.pad(eps, ((0, Bp - B), (0, 0)))
    else:
        x_p, eps_p = x, eps

    weights = (prep["w_in"], prep["qw2"], prep["cw2"], prep["cw3"],
               prep["wh_h"], prep["wh_y"], prep["pw1"], prep["pw2"],
               prep["pw3"], prep["bias_pack"])
    inputs = (x_p, eps_p) + weights

    in_specs = (
        [pl.BlockSpec((tile_b, nx), lambda i: (i, 0)),
         pl.BlockSpec((tile_b, nz), lambda i: (i, 0))]
        # Weights / packed biases: full-array blocks with constant index maps
        # -> DMA'd once, VMEM-resident across grid steps.
        + [pl.BlockSpec(w.shape, lambda i: (0, 0)) for w in weights]
    )
    out_specs = (
        pl.BlockSpec((tile_b, P), lambda i: (i, 0)),
        pl.BlockSpec((tile_b, nx), lambda i: (i, 0)),
    )
    out_shape = (
        jax.ShapeDtypeStruct((Bp, P), jnp.float32),    # [mu | logvar | c_z | 0]
        jax.ShapeDtypeStruct((Bp, nx), jnp.bfloat16),  # rec (halved writeback)
    )

    # Advisory cost estimate so XLA can schedule/overlap surrounding ops.
    flops = 2 * Bp * (nx * 2 * nh + 2 * nh * nh + nh * nclasses
                      + nh * P + nclasses * P
                      + nz * nh + nh * nh + nh * nx)
    transcendentals = Bp * (nclasses + nz + 2 * nx)
    bytes_accessed = (
        sum(int(v.size) * v.dtype.itemsize for v in inputs)
        + Bp * P * 4 + Bp * nx * 2
    )

    kernel = _make_kernel(nh, nz, act_dtype, bias_offs)
    call = pl.pallas_call(
        kernel,
        grid=(Bp // tile_b,),
        in_specs=in_specs,
        out_specs=out_specs,
        out_shape=out_shape,
        compiler_params=pltpu.CompilerParams(
            dimension_semantics=("parallel",),
            vmem_limit_bytes=32 << 20,
        ),
        cost_estimate=pl.CostEstimate(
            flops=flops,
            transcendentals=transcendentals,
            bytes_accessed=bytes_accessed,
        ),
    )
    head, rec = call(*inputs)
    head = head[:B]
    # Up-cast rec so the public output stays f32 (consumers accepting bf16
    # can drop this cast and keep the halved HBM writeback end-to-end).
    rec = rec[:B].astype(jnp.float32)
    return {
        "x": x,                              # returned directly (no kernel copy)
        "mu_z": head[:, :nz],
        "logvar_z": head[:, nz:2 * nz],
        "c_z": head[:, 2 * nz:3 * nz],
        "rec": rec,
    }


# --------------------------------------------------------------------------
# Parameter construction (PyTorch-style init) and prep (fold/fuse/pack/bf16)
# --------------------------------------------------------------------------
def make_raw_params(key, nx, nh, nz, nclasses):
    def linear(k, fin, fout):
        kw, kb = jax.random.split(k)
        bound = 1.0 / math.sqrt(fin)
        w = jax.random.uniform(kw, (fin, fout), jnp.float32, -bound, bound)
        b = jax.random.uniform(kb, (1, fout), jnp.float32, -bound, bound)
        return w, b

    keys = jax.random.split(key, 16)
    p = {}
    # Encoder Q
    p["qw1"], p["qb1"] = linear(keys[0], nx, nh)
    p["qw2"], p["qb2"] = linear(keys[1], nh, nh)
    p["qwmu"], p["qbmu"] = linear(keys[2], nh, nz)
    p["qwlv"], p["qblv"] = linear(keys[3], nh, nz)
    # Clusterer C
    p["cw1"], p["cb1"] = linear(keys[4], nx, nh)
    p["cw2"], p["cb2"] = linear(keys[5], nh, nh)
    p["cw3"], p["cb3"] = linear(keys[6], nh, nclasses)
    p["cwce"], p["cbce"] = linear(keys[7], nclasses, nz)
    # Decoder P
    p["pw1"], p["pb1"] = linear(keys[8], nz, nh)
    p["pw2"], p["pb2"] = linear(keys[9], nh, nh)
    p["pw3"], p["pb3"] = linear(keys[10], nh, nx)
    # BatchNorm1d (eval, fresh init): gamma=1, beta=0, running mean=0, var=1.
    bn = (jnp.ones((1, nh), jnp.float32), jnp.zeros((1, nh), jnp.float32),
          jnp.zeros((1, nh), jnp.float32), jnp.ones((1, nh), jnp.float32))
    for name in ("q_bn1", "q_bn2", "c_bn1", "c_bn2"):
        p[name] = bn
    return p


def prepare_params(raw, nz, nclasses):
    """Fold eval-mode BN into Linears, fuse matmuls, pack biases, cast bf16."""
    def fold(w, b, bn):
        g, beta, m, v = bn
        s = g / jnp.sqrt(v + BN_EPS)
        return w * s, (b - m) * s + beta

    qw1, qb1 = fold(raw["qw1"], raw["qb1"], raw["q_bn1"])
    qw2, qb2 = fold(raw["qw2"], raw["qb2"], raw["q_bn2"])
    cw1, cb1 = fold(raw["cw1"], raw["cb1"], raw["c_bn1"])
    cw2, cb2 = fold(raw["cw2"], raw["cb2"], raw["c_bn2"])
    nh = qw2.shape[0]
    nx = raw["pw3"].shape[1]

    # Fused input layer: both Q and C consume x.
    w_in = jnp.concatenate([qw1, cw1], axis=1)       # (nx, 2*nh)
    b_in = jnp.concatenate([qb1, cb1], axis=1)       # (1, 2*nh)

    # Lane-dense head: pack mu / logvar / c_z columns into a 128-wide slab.
    P = _round_up(3 * nz, 128)
    wh_h = jnp.zeros((nh, P), jnp.float32)
    wh_h = wh_h.at[:, :nz].set(raw["qwmu"]).at[:, nz:2 * nz].set(raw["qwlv"])
    wh_y = jnp.zeros((nclasses, P), jnp.float32)
    wh_y = wh_y.at[:, 2 * nz:3 * nz].set(raw["cwce"])
    b_head = jnp.zeros((1, P), jnp.float32)
    b_head = (b_head.at[:, :nz].set(raw["qbmu"])
                    .at[:, nz:2 * nz].set(raw["qblv"])
                    .at[:, 2 * nz:3 * nz].set(raw["cbce"]))

    # Pack the eight f32 bias rows into one array (128-lane-aligned segments).
    offs, total, sizes = _bias_layout(nh, nclasses, P, nx)
    segs = (b_in, qb2, cb2, raw["cb3"], b_head, raw["pb1"], raw["pb2"],
            raw["pb3"])
    pack = jnp.zeros((1, total), jnp.float32)
    for off, seg in zip(offs, segs):
        pack = pack.at[:, off:off + seg.shape[1]].set(seg)

    bf = lambda a: a.astype(jnp.bfloat16)
    return {
        "w_in": bf(w_in), "qw2": bf(qw2), "cw2": bf(cw2), "cw3": bf(raw["cw3"]),
        "wh_h": bf(wh_h), "wh_y": bf(wh_y),
        "pw1": bf(raw["pw1"]), "pw2": bf(raw["pw2"]), "pw3": bf(raw["pw3"]),
        "bias_pack": pack, "bias_offsets": offs,
    }


# --------------------------------------------------------------------------
# References
# --------------------------------------------------------------------------
def ae3_reference_prepared(x_img, eps, prep, act_dtype):
    """Mirrors the kernel math (bf16 operands, f32 accum, act_dtype
    element-wise, bf16 rec writeback); uses exact softmax/sigmoid divides."""
    B = x_img.shape[0]
    x = x_img.reshape(B, -1)
    nh = prep["qw2"].shape[0]
    nz = eps.shape[-1]
    nclasses = prep["cw3"].shape[1]
    P = prep["wh_h"].shape[1]
    nx = prep["pw3"].shape[1]
    offs, _, sizes = _bias_layout(nh, nclasses, P, nx)
    pack = prep["bias_pack"]
    b_in, qb2, cb2, cb3, b_head, pb1, pb2, pb3 = [
        pack[:, o:o + s] for o, s in zip(offs, sizes)]

    mm = lambda a, w: jnp.dot(a.astype(jnp.bfloat16), w,
                              preferred_element_type=jnp.float32)
    hg = mm(x, prep["w_in"]) + b_in
    h = _leaky(hg[:, :nh].astype(act_dtype))
    g = hg[:, nh:].astype(act_dtype)
    h = _leaky((mm(h, prep["qw2"]) + qb2).astype(act_dtype))
    g = _leaky((mm(g, prep["cw2"]) + cb2).astype(act_dtype))
    y = jax.nn.softmax(mm(g, prep["cw3"]) + cb3, axis=-1)
    head = mm(h, prep["wh_h"]) + mm(y, prep["wh_y"]) + b_head
    mu, lv, cz = head[:, :nz], head[:, nz:2 * nz], head[:, 2 * nz:3 * nz]
    z = mu + jnp.exp(0.5 * lv) * eps
    d = _leaky((mm(z, prep["pw1"]) + pb1).astype(act_dtype))
    d = _leaky((mm(d, prep["pw2"]) + pb2).astype(act_dtype))
    rec = jax.nn.sigmoid(mm(d, prep["pw3"]) + pb3)
    rec = rec.astype(jnp.bfloat16).astype(jnp.float32)   # mirror bf16 writeback
    return {"x": x, "mu_z": mu, "logvar_z": lv, "c_z": cz, "rec": rec}


def ae3_reference_f32(x_img, eps, raw):
    """Straight f32 PyTorch-eval semantics (BN with eps, no fusion)."""
    B = x_img.shape[0]
    x = x_img.reshape(B, -1)
    bn = lambda v, p: (v - p[2]) / jnp.sqrt(p[3] + BN_EPS) * p[0] + p[1]
    h = _leaky(bn(x @ raw["qw1"] + raw["qb1"], raw["q_bn1"]))
    h = _leaky(bn(h @ raw["qw2"] + raw["qb2"], raw["q_bn2"]))
    mu = h @ raw["qwmu"] + raw["qbmu"]
    lv = h @ raw["qwlv"] + raw["qblv"]
    g = bn(x @ raw["cw1"] + raw["cb1"], raw["c_bn1"])
    g = _leaky(bn(g @ raw["cw2"] + raw["cb2"], raw["c_bn2"]))
    y = jax.nn.softmax(g @ raw["cw3"] + raw["cb3"], axis=-1)
    cz = y @ raw["cwce"] + raw["cbce"]
    z = mu + jnp.exp(0.5 * lv) * eps
    d = _leaky(z @ raw["pw1"] + raw["pb1"])
    d = _leaky(d @ raw["pw2"] + raw["pb2"])
    rec = jax.nn.sigmoid(d @ raw["pw3"] + raw["pb3"])
    return {"x": x, "mu_z": mu, "logvar_z": lv, "c_z": cz, "rec": rec}


# --------------------------------------------------------------------------
if __name__ == "__main__":
    # Small shapes consistent with the module: image (B, C, H, W) flattened.
    B, C, H, W = 8, 1, 16, 16
    nx = C * H * W        # 256
    nh = 256
    nz = 16
    nclasses = 16

    root = jax.random.PRNGKey(0)
    k_x, k_eps, k_p = jax.random.split(root, 3)
    x_img = jax.random.normal(k_x, (B, C, H, W), jnp.float32)
    eps = jax.random.normal(k_eps, (B, nz), jnp.float32)   # reparam noise
    # TODO(synk): torch draws eps inside forward (randn_like); here it is an
    # explicit deterministic input since Pallas kernels take explicit RNG.

    raw = make_raw_params(k_p, nx, nh, nz, nclasses)
    prep = prepare_params(raw, nz, nclasses)

    act_dtype = _default_act_dtype()
    out = ae3_forward(x_img, eps, prep, act_dtype=act_dtype)
    jax.block_until_ready(out)

    # Tight-ish check against the exact math the kernel implements (bf16
    # operands/activations, f32 accum); rec/c_z tolerances absorb the
    # approx-reciprocal softmax/sigmoid and the bf16 rec writeback.
    ref = ae3_reference_prepared(x_img, eps, prep, act_dtype)
    tol = {"x": (0.0, 0.0), "mu_z": (2e-3, 2e-3), "logvar_z": (2e-3, 2e-3),
           "c_z": (5e-3, 5e-3), "rec": (1e-2, 1e-2)}
    for k in ("x", "mu_z", "logvar_z", "c_z", "rec"):
        assert out[k].shape == ref[k].shape, k
        atol, rtol = tol[k]
        assert jnp.allclose(out[k], ref[k], atol=atol, rtol=rtol), k

    # Loose check against the pure-f32 PyTorch-eval semantics (bf16 weights).
    spec = ae3_reference_f32(x_img, eps, raw)
    for k in ("mu_z", "logvar_z", "c_z", "rec"):
        assert jnp.allclose(out[k], spec[k], atol=1e-1, rtol=1e-1), k

    print("KERNEL_OK")
</pallas_src>

<mosaic_0001>
module attributes {stable_mosaic.version = 11 : i64} {
  func.func @kernel(%arg0: i32, %arg1: memref<16x256xf32, #tpu.memory_space<vmem>>, %arg2: memref<16x16xf32, #tpu.memory_space<vmem>>, %arg3: memref<256x512xbf16, #tpu.memory_space<vmem>>, %arg4: memref<256x256xbf16, #tpu.memory_space<vmem>>, %arg5: memref<256x256xbf16, #tpu.memory_space<vmem>>, %arg6: memref<256x16xbf16, #tpu.memory_space<vmem>>, %arg7: memref<256x128xbf16, #tpu.memory_space<vmem>>, %arg8: memref<16x128xbf16, #tpu.memory_space<vmem>>, %arg9: memref<16x256xbf16, #tpu.memory_space<vmem>>, %arg10: memref<256x256xbf16, #tpu.memory_space<vmem>>, %arg11: memref<256x256xbf16, #tpu.memory_space<vmem>>, %arg12: memref<1x2048xf32, #tpu.memory_space<vmem>>, %arg13: memref<16x128xf32, #tpu.memory_space<vmem>>, %arg14: memref<16x256xbf16, #tpu.memory_space<vmem>>) attributes {dimension_semantics = [#tpu.dimension_semantics<parallel>], iteration_bounds = array<i64: 1>, scalar_prefetch = 0 : i64, scratch_operands = 0 : i64, tpu.core_type = #tpu.core_type<tc>, window_params = [{transform_indices = @transform_0, window_bounds = array<i64: 16, 256>}, {transform_indices = @transform_1, window_bounds = array<i64: 16, 16>}, {pipeline_mode = #tpu.pipeline_mode<synchronous>, transform_indices = @transform_2, window_bounds = array<i64: 256, 512>}, {pipeline_mode = #tpu.pipeline_mode<synchronous>, transform_indices = @transform_3, window_bounds = array<i64: 256, 256>}, {pipeline_mode = #tpu.pipeline_mode<synchronous>, transform_indices = @transform_4, window_bounds = array<i64: 256, 256>}, {pipeline_mode = #tpu.pipeline_mode<synchronous>, transform_indices = @transform_5, window_bounds = array<i64: 256, 16>}, {pipeline_mode = #tpu.pipeline_mode<synchronous>, transform_indices = @transform_6, window_bounds = array<i64: 256, 128>}, {pipeline_mode = #tpu.pipeline_mode<synchronous>, transform_indices = @transform_7, window_bounds = array<i64: 16, 128>}, {pipeline_mode = #tpu.pipeline_mode<synchronous>, transform_indices = @transform_8, window_bounds = array<i64: 16, 256>}, {pipeline_mode = #tpu.pipeline_mode<synchronous>, transform_indices = @transform_9, window_bounds = array<i64: 256, 256>}, {pipeline_mode = #tpu.pipeline_mode<synchronous>, transform_indices = @transform_10, window_bounds = array<i64: 256, 256>}, {pipeline_mode = #tpu.pipeline_mode<synchronous>, transform_indices = @transform_11, window_bounds = array<i64: 1, 2048>}, {transform_indices = @transform_12, window_bounds = array<i64: 16, 128>}, {transform_indices = @transform_13, window_bounds = array<i64: 16, 256>}]} {
    %c0 = arith.constant 0 : index
    %c0_0 = arith.constant 0 : index
    %0 = vector.load %arg1[%c0, %c0_0] : memref<16x256xf32, #tpu.memory_space<vmem>>, vector<16x256xf32>
    %1 = arith.truncf %0 : vector<16x256xf32> to vector<16x256xbf16>
    %c0_1 = arith.constant 0 : index
    %c0_2 = arith.constant 0 : index
    %2 = vector.load %arg3[%c0_1, %c0_2] : memref<256x512xbf16, #tpu.memory_space<vmem>>, vector<256x512xbf16>
    %cst = arith.constant dense<0.000000e+00> : vector<16x512xf32>
    %3 = tpu.matmul %1, %2, %cst {dimension_numbers = #tpu.dot_dimension_numbers<[1], [0], [0], [1], [0, 0, 1, 1], [], []>} : vector<16x256xbf16>, vector<256x512xbf16>, vector<16x512xf32> -> vector<16x512xf32>
    %c0_3 = arith.constant 0 : index
    %c0_4 = arith.constant 0 : index
    %4 = vector.load %arg12[%c0_3, %c0_4] : memref<1x2048xf32, #tpu.memory_space<vmem>>, vector<1x512xf32>
    %5 = vector.broadcast %4 : vector<1x512xf32> to vector<16x512xf32>
    %6 = arith.addf %3, %5 : vector<16x512xf32>
    %7 = vector.extract_strided_slice %6 {offsets = [0, 0], sizes = [16, 256], strides = [1, 1]} : vector<16x512xf32> to vector<16x256xf32>
    %8 = arith.truncf %7 : vector<16x256xf32> to vector<16x256xbf16>
    %cst_5 = arith.constant 0.000000e+00 : bf16
    %9 = vector.broadcast %cst_5 : bf16 to vector<16x256xbf16>
    %10 = arith.cmpf oge, %8, %9 : vector<16x256xbf16>
    %cst_6 = arith.constant 1.000980e-02 : bf16
    %11 = vector.broadcast %cst_6 : bf16 to vector<16x256xbf16>
    %12 = arith.mulf %11, %8 : vector<16x256xbf16>
    %13 = arith.select %10, %8, %12 : vector<16x256xi1>, vector<16x256xbf16>
    %14 = vector.extract_strided_slice %6 {offsets = [0, 256], sizes = [16, 256], strides = [1, 1]} : vector<16x512xf32> to vector<16x256xf32>
    %15 = arith.truncf %14 : vector<16x256xf32> to vector<16x256xbf16>
    %c0_7 = arith.constant 0 : index
    %c0_8 = arith.constant 0 : index
    %16 = vector.load %arg4[%c0_7, %c0_8] : memref<256x256xbf16, #tpu.memory_space<vmem>>, vector<256x256xbf16>
    %cst_9 = arith.constant dense<0.000000e+00> : vector<16x256xf32>
    %17 = tpu.matmul %13, %16, %cst_9 {dimension_numbers = #tpu.dot_dimension_numbers<[1], [0], [0], [1], [0, 0, 1, 1], [], []>} : vector<16x256xbf16>, vector<256x256xbf16>, vector<16x256xf32> -> vector<16x256xf32>
    %c0_10 = arith.constant 0 : index
    %c512 = arith.constant 512 : index
    %18 = vector.load %arg12[%c0_10, %c512] : memref<1x2048xf32, #tpu.memory_space<vmem>>, vector<1x256xf32>
    %19 = vector.broadcast %18 : vector<1x256xf32> to vector<16x256xf32>
    %20 = arith.addf %17, %19 : vector<16x256xf32>
    %21 = arith.truncf %20 : vector<16x256xf32> to vector<16x256xbf16>
    %cst_11 = arith.constant 0.000000e+00 : bf16
    %22 = vector.broadcast %cst_11 : bf16 to vector<16x256xbf16>
    %23 = arith.cmpf oge, %21, %22 : vector<16x256xbf16>
    %cst_12 = arith.constant 1.000980e-02 : bf16
    %24 = vector.broadcast %cst_12 : bf16 to vector<16x256xbf16>
    %25 = arith.mulf %24, %21 : vector<16x256xbf16>
    %26 = arith.select %23, %21, %25 : vector<16x256xi1>, vector<16x256xbf16>
    %c0_13 = arith.constant 0 : index
    %c0_14 = arith.constant 0 : index
    %27 = vector.load %arg5[%c0_13, %c0_14] : memref<256x256xbf16, #tpu.memory_space<vmem>>, vector<256x256xbf16>
    %cst_15 = arith.constant dense<0.000000e+00> : vector<16x256xf32>
    %28 = tpu.matmul %15, %27, %cst_15 {dimension_numbers = #tpu.dot_dimension_numbers<[1], [0], [0], [1], [0, 0, 1, 1], [], []>} : vector<16x256xbf16>, vector<256x256xbf16>, vector<16x256xf32> -> vector<16x256xf32>
    %c0_16 = arith.constant 0 : index
    %c768 = arith.constant 768 : index
    %29 = vector.load %arg12[%c0_16, %c768] : memref<1x2048xf32, #tpu.memory_space<vmem>>, vector<1x256xf32>
    %30 = vector.broadcast %29 : vector<1x256xf32> to vector<16x256xf32>
    %31 = arith.addf %28, %30 : vector<16x256xf32>
    %32 = arith.truncf %31 : vector<16x256xf32> to vector<16x256xbf16>
    %cst_17 = arith.constant 0.000000e+00 : bf16
    %33 = vector.broadcast %cst_17 : bf16 to vector<16x256xbf16>
    %34 = arith.cmpf oge, %32, %33 : vector<16x256xbf16>
    %cst_18 = arith.constant 1.000980e-02 : bf16
    %35 = vector.broadcast %cst_18 : bf16 to vector<16x256xbf16>
    %36 = arith.mulf %35, %32 : vector<16x256xbf16>
    %37 = arith.select %34, %32, %36 : vector<16x256xi1>, vector<16x256xbf16>
    %c0_19 = arith.constant 0 : index
    %c0_20 = arith.constant 0 : index
    %38 = vector.load %arg6[%c0_19, %c0_20] : memref<256x16xbf16, #tpu.memory_space<vmem>>, vector<256x16xbf16>
    %cst_21 = arith.constant dense<0.000000e+00> : vector<16x16xf32>
    %39 = tpu.matmul %37, %38, %cst_21 {dimension_numbers = #tpu.dot_dimension_numbers<[1], [0], [0], [1], [0, 0, 1, 1], [], []>} : vector<16x256xbf16>, vector<256x16xbf16>, vector<16x16xf32> -> vector<16x16xf32>
    %c0_22 = arith.constant 0 : index
    %c1024 = arith.constant 1024 : index
    %40 = vector.load %arg12[%c0_22, %c1024] : memref<1x2048xf32, #tpu.memory_space<vmem>>, vector<1x16xf32>
    %41 = vector.broadcast %40 : vector<1x16xf32> to vector<16x16xf32>
    %42 = arith.addf %39, %41 : vector<16x16xf32>
    %cst_23 = arith.constant dense<0xFF800000> : vector<16xf32>
    %43 = vector.multi_reduction <maximumf>, %42, %cst_23 [1] : vector<16x16xf32> to vector<16xf32>
    %44 = vector.shape_cast %43 : vector<16xf32> to vector<16x1xf32>
    %45 = vector.broadcast %44 : vector<16x1xf32> to vector<16x16xf32>
    %46 = arith.subf %42, %45 : vector<16x16xf32>
    %47 = math.exp %46 : vector<16x16xf32>
    %cst_24 = arith.constant dense<0.000000e+00> : vector<16xf32>
    %48 = vector.multi_reduction <add>, %47, %cst_24 [1] : vector<16x16xf32> to vector<16xf32>
    %49 = vector.shape_cast %48 : vector<16xf32> to vector<16x1xf32>
    %50 = tpu.reciprocal %49 {approx = true} : vector<16x1xf32> -> vector<16x1xf32>
    %51 = vector.broadcast %50 : vector<16x1xf32> to vector<16x16xf32>
    %52 = arith.mulf %47, %51 : vector<16x16xf32>
    %c0_25 = arith.constant 0 : index
    %c0_26 = arith.constant 0 : index
    %53 = vector.load %arg7[%c0_25, %c0_26] : memref<256x128xbf16, #tpu.memory_space<vmem>>, vector<256x128xbf16>
    %cst_27 = arith.constant dense<0.000000e+00> : vector<16x128xf32>
    %54 = tpu.matmul %26, %53, %cst_27 {dimension_numbers = #tpu.dot_dimension_numbers<[1], [0], [0], [1], [0, 0, 1, 1], [], []>} : vector<16x256xbf16>, vector<256x128xbf16>, vector<16x128xf32> -> vector<16x128xf32>
    %55 = arith.truncf %52 : vector<16x16xf32> to vector<16x16xbf16>
    %c0_28 = arith.constant 0 : index
    %c0_29 = arith.constant 0 : index
    %56 = vector.load %arg8[%c0_28, %c0_29] : memref<16x128xbf16, #tpu.memory_space<vmem>>, vector<16x128xbf16>
    %cst_30 = arith.constant dense<0.000000e+00> : vector<16x128xf32>
    %57 = tpu.matmul %55, %56, %cst_30 {dimension_numbers = #tpu.dot_dimension_numbers<[1], [0], [0], [1], [0, 0, 1, 1], [], []>} : vector<16x16xbf16>, vector<16x128xbf16>, vector<16x128xf32> -> vector<16x128xf32>
    %58 = arith.addf %54, %57 : vector<16x128xf32>
    %c0_31 = arith.constant 0 : index
    %c1152 = arith.constant 1152 : index
    %59 = vector.load %arg12[%c0_31, %c1152] : memref<1x2048xf32, #tpu.memory_space<vmem>>, vector<1x128xf32>
    %60 = vector.broadcast %59 : vector<1x128xf32> to vector<16x128xf32>
    %61 = arith.addf %58, %60 : vector<16x128xf32>
    %c0_32 = arith.constant 0 : index
    %c0_33 = arith.constant 0 : index
    %62 = vector.load %arg13[%c0_32, %c0_33] : memref<16x128xf32, #tpu.memory_space<vmem>>, vector<16x128xf32>
    tpu.vector_store %arg13[%c0_32, %c0_33], %61 {strides = array<i32>} : memref<16x128xf32, #tpu.memory_space<vmem>>, vector<16x128xf32>,
    %63 = vector.extract_strided_slice %61 {offsets = [0, 0], sizes = [16, 16], strides = [1, 1]} : vector<16x128xf32> to vector<16x16xf32>
    %64 = vector.extract_strided_slice %61 {offsets = [0, 16], sizes = [16, 16], strides = [1, 1]} : vector<16x128xf32> to vector<16x16xf32>
    %cst_34 = arith.constant 5.000000e-01 : f32
    %65 = vector.broadcast %cst_34 : f32 to vector<16x16xf32>
    %66 = arith.mulf %65, %64 : vector<16x16xf32>
    %67 = math.exp %66 : vector<16x16xf32>
    %c0_35 = arith.constant 0 : index
    %c0_36 = arith.constant 0 : index
    %68 = vector.load %arg2[%c0_35, %c0_36] : memref<16x16xf32, #tpu.memory_space<vmem>>, vector<16x16xf32>
    %69 = arith.mulf %67, %68 : vector<16x16xf32>
    %70 = arith.addf %63, %69 : vector<16x16xf32>
    %71 = arith.truncf %70 : vector<16x16xf32> to vector<16x16xbf16>
    %c0_37 = arith.constant 0 : index
    %c0_38 = arith.constant 0 : index
    %72 = vector.load %arg9[%c0_37, %c0_38] : memref<16x256xbf16, #tpu.memory_space<vmem>>, vector<16x256xbf16>
    %cst_39 = arith.constant dense<0.000000e+00> : vector<16x256xf32>
    %73 = tpu.matmul %71, %72, %cst_39 {dimension_numbers = #tpu.dot_dimension_numbers<[1], [0], [0], [1], [0, 0, 1, 1], [], []>} : vector<16x16xbf16>, vector<16x256xbf16>, vector<16x256xf32> -> vector<16x256xf32>
    %c0_40 = arith.constant 0 : index
    %c1280 = arith.constant 1280 : index
    %74 = vector.load %arg12[%c0_40, %c1280] : memref<1x2048xf32, #tpu.memory_space<vmem>>, vector<1x256xf32>
    %75 = vector.broadcast %74 : vector<1x256xf32> to vector<16x256xf32>
    %76 = arith.addf %73, %75 : vector<16x256xf32>
    %77 = arith.truncf %76 : vector<16x256xf32> to vector<16x256xbf16>
    %cst_41 = arith.constant 0.000000e+00 : bf16
    %78 = vector.broadcast %cst_41 : bf16 to vector<16x256xbf16>
    %79 = arith.cmpf oge, %77, %78 : vector<16x256xbf16>
    %cst_42 = arith.constant 1.000980e-02 : bf16
    %80 = vector.broadcast %cst_42 : bf16 to vector<16x256xbf16>
    %81 = arith.mulf %80, %77 : vector<16x256xbf16>
    %82 = arith.select %79, %77, %81 : vector<16x256xi1>, vector<16x256xbf16>
    %c0_43 = arith.constant 0 : index
    %c0_44 = arith.constant 0 : index
    %83 = vector.load %arg10[%c0_43, %c0_44] : memref<256x256xbf16, #tpu.memory_space<vmem>>, vector<256x256xbf16>
    %cst_45 = arith.constant dense<0.000000e+00> : vector<16x256xf32>
    %84 = tpu.matmul %82, %83, %cst_45 {dimension_numbers = #tpu.dot_dimension_numbers<[1], [0], [0], [1], [0, 0, 1, 1], [], []>} : vector<16x256xbf16>, vector<256x256xbf16>, vector<16x256xf32> -> vector<16x256xf32>
    %c0_46 = arith.constant 0 : index
    %c1536 = arith.constant 1536 : index
    %85 = vector.load %arg12[%c0_46, %c1536] : memref<1x2048xf32, #tpu.memory_space<vmem>>, vector<1x256xf32>
    %86 = vector.broadcast %85 : vector<1x256xf32> to vector<16x256xf32>
    %87 = arith.addf %84, %86 : vector<16x256xf32>
    %88 = arith.truncf %87 : vector<16x256xf32> to vector<16x256xbf16>
    %cst_47 = arith.constant 0.000000e+00 : bf16
    %89 = vector.broadcast %cst_47 : bf16 to vector<16x256xbf16>
    %90 = arith.cmpf oge, %88, %89 : vector<16x256xbf16>
    %cst_48 = arith.constant 1.000980e-02 : bf16
    %91 = vector.broadcast %cst_48 : bf16 to vector<16x256xbf16>
    %92 = arith.mulf %91, %88 : vector<16x256xbf16>
    %93 = arith.select %90, %88, %92 : vector<16x256xi1>, vector<16x256xbf16>
    %c0_49 = arith.constant 0 : index
    %c0_50 = arith.constant 0 : index
    %94 = vector.load %arg11[%c0_49, %c0_50] : memref<256x256xbf16, #tpu.memory_space<vmem>>, vector<256x256xbf16>
    %cst_51 = arith.constant dense<0.000000e+00> : vector<16x256xf32>
    %95 = tpu.matmul %93, %94, %cst_51 {dimension_numbers = #tpu.dot_dimension_numbers<[1], [0], [0], [1], [0, 0, 1, 1], [], []>} : vector<16x256xbf16>, vector<256x256xbf16>, vector<16x256xf32> -> vector<16x256xf32>
    %c0_52 = arith.constant 0 : index
    %c1792 = arith.constant 1792 : index
    %96 = vector.load %arg12[%c0_52, %c1792] : memref<1x2048xf32, #tpu.memory_space<vmem>>, vector<1x256xf32>
    %97 = vector.broadcast %96 : vector<1x256xf32> to vector<16x256xf32>
    %98 = arith.addf %95, %97 : vector<16x256xf32>
    %cst_53 = arith.constant 0.000000e+00 : f32
    %99 = vector.broadcast %cst_53 : f32 to vector<16x256xf32>
    %100 = arith.subf %99, %98 : vector<16x256xf32>
    %101 = math.exp %100 : vector<16x256xf32>
    %cst_54 = arith.constant 1.000000e+00 : f32
    %102 = vector.broadcast %cst_54 : f32 to vector<16x256xf32>
    %103 = arith.addf %102, %101 : vector<16x256xf32>
    %104 = tpu.reciprocal %103 {approx = true} : vector<16x256xf32> -> vector<16x256xf32>
    %105 = arith.truncf %104 : vector<16x256xf32> to vector<16x256xbf16>
    %c0_55 = arith.constant 0 : index
    %c0_56 = arith.constant 0 : index
    %106 = vector.load %arg14[%c0_55, %c0_56] : memref<16x256xbf16, #tpu.memory_space<vmem>>, vector<16x256xbf16>
    tpu.vector_store %arg14[%c0_55, %c0_56], %105 {strides = array<i32>} : memref<16x256xbf16, #tpu.memory_space<vmem>>, vector<16x256xbf16>,
    return
  }
  func.func @transform_0(%arg0: i32) -> (i32, i32) {
    %c0_i32 = arith.constant 0 : i32
    %c0_i32_0 = arith.constant 0 : i32
    return %arg0, %c0_i32 : i32, i32
  }
  func.func @transform_1(%arg0: i32) -> (i32, i32) {
    %c0_i32 = arith.constant 0 : i32
    %c0_i32_0 = arith.constant 0 : i32
    return %arg0, %c0_i32 : i32, i32
  }
  func.func @transform_2(%arg0: i32) -> (i32, i32) {
    %c0_i32 = arith.constant 0 : i32
    %c0_i32_0 = arith.constant 0 : i32
    %c0_i32_1 = arith.constant 0 : i32
    return %c0_i32, %c0_i32_0 : i32, i32
  }
  func.func @transform_3(%arg0: i32) -> (i32, i32) {
    %c0_i32 = arith.constant 0 : i32
    %c0_i32_0 = arith.constant 0 : i32
    %c0_i32_1 = arith.constant 0 : i32
    return %c0_i32, %c0_i32_0 : i32, i32
  }
  func.func @transform_4(%arg0: i32) -> (i32, i32) {
    %c0_i32 = arith.constant 0 : i32
    %c0_i32_0 = arith.constant 0 : i32
    %c0_i32_1 = arith.constant 0 : i32
    return %c0_i32, %c0_i32_0 : i32, i32
  }
  func.func @transform_5(%arg0: i32) -> (i32, i32) {
    %c0_i32 = arith.constant 0 : i32
    %c0_i32_0 = arith.constant 0 : i32
    %c0_i32_1 = arith.constant 0 : i32
    return %c0_i32, %c0_i32_0 : i32, i32
  }
  func.func @transform_6(%arg0: i32) -> (i32, i32) {
    %c0_i32 = arith.constant 0 : i32
    %c0_i32_0 = arith.constant 0 : i32
    %c0_i32_1 = arith.constant 0 : i32
    return %c0_i32, %c0_i32_0 : i32, i32
  }
  func.func @transform_7(%arg0: i32) -> (i32, i32) {
    %c0_i32 = arith.constant 0 : i32
    %c0_i32_0 = arith.constant 0 : i32
    %c0_i32_1 = arith.constant 0 : i32
    return %c0_i32, %c0_i32_0 : i32, i32
  }
  func.func @transform_8(%arg0: i32) -> (i32, i32) {
    %c0_i32 = arith.constant 0 : i32
    %c0_i32_0 = arith.constant 0 : i32
    %c0_i32_1 = arith.constant 0 : i32
    return %c0_i32, %c0_i32_0 : i32, i32
  }
  func.func @transform_9(%arg0: i32) -> (i32, i32) {
    %c0_i32 = arith.constant 0 : i32
    %c0_i32_0 = arith.constant 0 : i32
    %c0_i32_1 = arith.constant 0 : i32
    return %c0_i32, %c0_i32_0 : i32, i32
  }
  func.func @transform_10(%arg0: i32) -> (i32, i32) {
    %c0_i32 = arith.constant 0 : i32
    %c0_i32_0 = arith.constant 0 : i32
    %c0_i32_1 = arith.constant 0 : i32
    return %c0_i32, %c0_i32_0 : i32, i32
  }
  func.func @transform_11(%arg0: i32) -> (i32, i32) {
    %c0_i32 = arith.constant 0 : i32
    %c0_i32_0 = arith.constant 0 : i32
    %c0_i32_1 = arith.constant 0 : i32
    return %c0_i32, %c0_i32_0 : i32, i32
  }
  func.func @transform_12(%arg0: i32) -> (i32, i32) {
    %c0_i32 = arith.constant 0 : i32
    %c0_i32_0 = arith.constant 0 : i32
    return %arg0, %c0_i32 : i32, i32
  }
  func.func @transform_13(%arg0: i32) -> (i32, i32) {
    %c0_i32 = arith.constant 0 : i32
    %c0_i32_0 = arith.constant 0 : i32
    return %arg0, %c0_i32 : i32, i32
  }
}

</mosaic_0001>

<llo_original>
// kernel: tpu_custom_call.1
$region0: #{tpu_custom_call.1}
  #allocation0 [shape = 'u32[]', space=smem, size = 0x4, offset = 0x4, fixed_abs, tag = 'smem constant byte address 0x4 - core index']
  #allocation1 [shape = 'u32[144,128]{1,0:T(1,128)}', space=vmem, size = 0x12000, scoped, tag = 'internal scratch']
  %s0 = inlined_call_operand.hbm [shape: f32[16,256], index: 0, kind: input, shape index: {}]
  %s1 = inlined_call_operand.vmem [shape: f32[16,16], index: 1, kind: input, shape index: {}]
  %s2 = inlined_call_operand.hbm [shape: bf16[256,512], index: 2, kind: input, shape index: {}]
  %s3 = inlined_call_operand.hbm [shape: bf16[256,256], index: 3, kind: input, shape index: {}]
  %s4 = inlined_call_operand.hbm [shape: bf16[256,256], index: 4, kind: input, shape index: {}]
  %s5 = inlined_call_operand.vmem [shape: bf16[256,16], index: 5, kind: input, shape index: {}]
  %s6 = inlined_call_operand.vmem [shape: bf16[256,128], index: 6, kind: input, shape index: {}]
  %s7 = inlined_call_operand.hbm [shape: bf16[16,128], index: 7, kind: input, shape index: {}]
  %s8 = inlined_call_operand.hbm [shape: bf16[16,256], index: 8, kind: input, shape index: {}]
  %s9 = inlined_call_operand.hbm [shape: bf16[256,256], index: 9, kind: input, shape index: {}]
  %s10 = inlined_call_operand.hbm [shape: bf16[256,256], index: 10, kind: input, shape index: {}]
  %s11 = inlined_call_operand.vmem [shape: f32[1,2048], index: 11, kind: input, shape index: {}]
  %s12 = inlined_call_operand.hbm [shape: f32[16,128], index: 12, kind: output, shape index: {0}]
  %s13 = inlined_call_operand.hbm [shape: bf16[16,256], index: 13, kind: output, shape index: {1}]
  %14 = xla_tuple %s12, %s13
  %s15 = sld [smem:[#allocation0]]
  $region98: #{tpu_custom_call.1} parent=0
    _
  %s17 = ssub.s32 1, %s15
  %s18 = scalar_select 0, %s17, %s15
  $region1: #{tpu_custom_call.1} parent=0
    #allocation2 [shape = 'u8[16384]{0}', space=vmem, size = 0x4000, scoped, tag = 'input window, operand 0, single buffered']
    #allocation3 [shape = 's32[1]{0}', space=sflag, size = 0x4, scoped, tag = 'scoped memory for tpu_custom_call.1']
    #allocation4 [shape = 's32[1]{0}', space=sflag, size = 0x4, scoped, tag = 'scoped memory for tpu_custom_call.1']
    #allocation5 [shape = 'u8[262144]{0}', space=vmem, size = 0x40000, scoped, tag = 'input window, operand 2, single buffered']
    #allocation6 [shape = 's32[1]{0}', space=sflag, size = 0x4, scoped, tag = 'scoped memory for tpu_custom_call.1']
    #allocation7 [shape = 'u8[131072]{0}', space=vmem, size = 0x20000, scoped, tag = 'input window, operand 3, single buffered']
    #allocation8 [shape = 'u8[131072]{0}', space=vmem, size = 0x20000, scoped, tag = 'input window, operand 4, single buffered']
    #allocation9 [shape = 's32[1]{0}', space=sflag, size = 0x4, scoped, tag = 'scoped memory for tpu_custom_call.1']
    #allocation10 [shape = 'u8[4096]{0}', space=vmem, size = 0x1000, scoped, tag = 'input window, operand 7, single buffered']
    #allocation11 [shape = 'u8[8192]{0}', space=vmem, size = 0x2000, scoped, tag = 'input window, operand 8, single buffered']
    #allocation12 [shape = 's32[1]{0}', space=sflag, size = 0x4, scoped, tag = 'scoped memory for tpu_custom_call.1']
    #allocation13 [shape = 'u8[131072]{0}', space=vmem, size = 0x20000, scoped, tag = 'input window, operand 9, single buffered']
    #allocation14 [shape = 'u8[131072]{0}', space=vmem, size = 0x20000, scoped, tag = 'input window, operand 10, single buffered']
    #allocation15 [shape = 's32[1]{0}', space=sflag, size = 0x4, scoped, tag = 'scoped memory for tpu_custom_call.1']
    #allocation16 [shape = 'u8[8192]{0}', space=vmem, size = 0x2000, scoped, tag = 'output window, operand 0, single buffered']
    #allocation17 [shape = 'u8[8192]{0}', space=vmem, size = 0x2000, scoped, tag = 'output window, operand 1, single buffered']
    #allocation18 [shape = 's32[1]{0}', space=sflag, size = 0x4, scoped, tag = 'scoped memory for tpu_custom_call.1']
    %19 = vsyncpa [#allocation3], 0
    %20 = vsyncpa [#allocation6], 0
    %21 = vsyncpa [#allocation9], 0
    %22 = vsyncpa [#allocation12], 0
    %23 = vsyncpa [#allocation15], 0
    %24 = vsyncpa [#allocation4], 0
    %25 = vsyncpa [#allocation18], 0
    // Predicated region
    $region2: #{tpu_custom_call.1} parent=1 // pred_check
      _
    $region3: #{tpu_custom_call.1} parent=1 // pred_check_branch
      %27 = sbr.rel (0) target = $region5
    $region4: #{tpu_custom_call.1} parent=1 // pred_region
      %s29 = ssub.s32 512, 512
      %30 = vsyncadd [#allocation3], %s29
      %s31 = sshll.u32 [#allocation2], 4
      %s32 = int_to_ptr.vmem [resolvable:$true] %s31
      %37 = dma.hbm_to_vmem [thread:$0]  %s0, 512, %s32, [#allocation3], 256, 256, 16
    $region5: #{tpu_custom_call.1} parent=1 // pred_fallthru
      _
    // Predicated region
    $region6: #{tpu_custom_call.1} parent=1 // pred_check
      _
    $region7: #{tpu_custom_call.1} parent=1 // pred_check_branch
      %39 = sbr.rel (0) target = $region9
    $region8: #{tpu_custom_call.1} parent=1 // pred_region
      _
    $region9: #{tpu_custom_call.1} parent=1 // pred_fallthru
      _
    // Predicated region
    $region10: #{tpu_custom_call.1} parent=1 // pred_check
      _
    $region11: #{tpu_custom_call.1} parent=1 // pred_check_branch
      %41 = sbr.rel (0) target = $region13
    $region12: #{tpu_custom_call.1} parent=1 // pred_region
      %s43 = ssub.s32 8192, 8192
      %44 = vsyncadd [#allocation6], %s43
      %s45 = sshll.u32 [#allocation5], 4
      %s46 = int_to_ptr.vmem [resolvable:$true] %s45
      %51 = dma.hbm_to_vmem [thread:$0]  %s2, 8192, %s46, [#allocation6], 256, 256, 16
    $region13: #{tpu_custom_call.1} parent=1 // pred_fallthru
      _
    // Predicated region
    $region14: #{tpu_custom_call.1} parent=1 // pred_check
      _
    $region15: #{tpu_custom_call.1} parent=1 // pred_check_branch
      %53 = sbr.rel (0) target = $region17
    $region16: #{tpu_custom_call.1} parent=1 // pred_region
      %s55 = ssub.s32 4096, 4096
      %56 = vsyncadd [#allocation6], %s55
      %s57 = sshll.u32 [#allocation7], 4
      %s58 = int_to_ptr.vmem [resolvable:$true] %s57
      %63 = dma.hbm_to_vmem [thread:$0]  %s3, 4096, %s58, [#allocation6], 128, 128, 8
    $region17: #{tpu_custom_call.1} parent=1 // pred_fallthru
      _
    // Predicated region
    $region18: #{tpu_custom_call.1} parent=1 // pred_check
      _
    $region19: #{tpu_custom_call.1} parent=1 // pred_check_branch
      %65 = sbr.rel (0) target = $region21
    $region20: #{tpu_custom_call.1} parent=1 // pred_region
      %s67 = ssub.s32 4096, 4096
      %68 = vsyncadd [#allocation9], %s67
      %s69 = sshll.u32 [#allocation8], 4
      %s70 = int_to_ptr.vmem [resolvable:$true] %s69
      %75 = dma.hbm_to_vmem [thread:$0]  %s4, 4096, %s70, [#allocation9], 128, 128, 8
    $region21: #{tpu_custom_call.1} parent=1 // pred_fallthru
      _
    // Predicated region
    $region22: #{tpu_custom_call.1} parent=1 // pred_check
      _
    $region23: #{tpu_custom_call.1} parent=1 // pred_check_branch
      %77 = sbr.rel (0) target = $region25
    $region24: #{tpu_custom_call.1} parent=1 // pred_region
      _
    $region25: #{tpu_custom_call.1} parent=1 // pred_fallthru
      _
    // Predicated region
    $region26: #{tpu_custom_call.1} parent=1 // pred_check
      _
    $region27: #{tpu_custom_call.1} parent=1 // pred_check_branch
      %79 = sbr.rel (0) target = $region29
    $region28: #{tpu_custom_call.1} parent=1 // pred_region
      _
    $region29: #{tpu_custom_call.1} parent=1 // pred_fallthru
      _
    // Predicated region
    $region30: #{tpu_custom_call.1} parent=1 // pred_check
      _
    $region31: #{tpu_custom_call.1} parent=1 // pred_check_branch
      %81 = sbr.rel (0) target = $region33
    $region32: #{tpu_custom_call.1} parent=1 // pred_region
      %s83 = ssub.s32 128, 128
      %84 = vsyncadd [#allocation9], %s83
      %s85 = sshll.u32 [#allocation10], 4
      %s86 = int_to_ptr.vmem [resolvable:$true] %s85
      %91 = dma.hbm_to_vmem [thread:$0]  %s7, 128, %s86, [#allocation9], 64, 64, 4
    $region33: #{tpu_custom_call.1} parent=1 // pred_fallthru
      _
    // Predicated region
    $region34: #{tpu_custom_call.1} parent=1 // pred_check
      _
    $region35: #{tpu_custom_call.1} parent=1 // pred_check_branch
      %93 = sbr.rel (0) target = $region37
    $region36: #{tpu_custom_call.1} parent=1 // pred_region
      %s95 = ssub.s32 256, 256
      %96 = vsyncadd [#allocation12], %s95
      %s97 = sshll.u32 [#allocation11], 4
      %s98 = int_to_ptr.vmem [resolvable:$true] %s97
      %103 = dma.hbm_to_vmem [thread:$0]  %s8, 256, %s98, [#allocation12], 128, 128, 8
    $region37: #{tpu_custom_call.1} parent=1 // pred_fallthru
      _
    // Predicated region
    $region38: #{tpu_custom_call.1} parent=1 // pred_check
      _
    $region39: #{tpu_custom_call.1} parent=1 // pred_check_branch
      %105 = sbr.rel (0) target = $region41
    $region40: #{tpu_custom_call.1} parent=1 // pred_region
      %s107 = ssub.s32 4096, 4096
      %108 = vsyncadd [#allocation12], %s107
      %s109 = sshll.u32 [#allocation13], 4
      %s110 = int_to_ptr.vmem [resolvable:$true] %s109
      %115 = dma.hbm_to_vmem [thread:$0]  %s9, 4096, %s110, [#allocation12], 128, 128, 8
    $region41: #{tpu_custom_call.1} parent=1 // pred_fallthru
      _
    // Predicated region
    $region42: #{tpu_custom_call.1} parent=1 // pred_check
      _
    $region43: #{tpu_custom_call.1} parent=1 // pred_check_branch
      %117 = sbr.rel (0) target = $region45
    $region44: #{tpu_custom_call.1} parent=1 // pred_region
      %s119 = ssub.s32 4096, 4096
      %120 = vsyncadd [#allocation15], %s119
      %s121 = sshll.u32 [#allocation14], 4
      %s122 = int_to_ptr.vmem [resolvable:$true] %s121
      %127 = dma.hbm_to_vmem [thread:$0]  %s10, 4096, %s122, [#allocation15], 128, 128, 8
    $region45: #{tpu_custom_call.1} parent=1 // pred_fallthru
      _
    // Predicated region
    $region46: #{tpu_custom_call.1} parent=1 // pred_check
      _
    $region47: #{tpu_custom_call.1} parent=1 // pred_check_branch
      %129 = sbr.rel (0) target = $region49
    $region48: #{tpu_custom_call.1} parent=1 // pred_region
      _
    $region49: #{tpu_custom_call.1} parent=1 // pred_fallthru
      _
    // Predicated region
    $region50: #{tpu_custom_call.1} parent=1 // pred_check
      _
    $region51: #{tpu_custom_call.1} parent=1 // pred_check_branch
      %131 = sbr.rel (0) target = $region53
    $region52: #{tpu_custom_call.1} parent=1 // pred_region
      %132 = dma.done [#allocation3], 512
    $region53: #{tpu_custom_call.1} parent=1 // pred_fallthru
      _
    // Predicated region
    $region54: #{tpu_custom_call.1} parent=1 // pred_check
      _
    $region55: #{tpu_custom_call.1} parent=1 // pred_check_branch
      %134 = sbr.rel (0) target = $region57
    $region56: #{tpu_custom_call.1} parent=1 // pred_region
      %135 = dma.done [#allocation6], 8192
    $region57: #{tpu_custom_call.1} parent=1 // pred_fallthru
      _
    // Predicated region
    $region58: #{tpu_custom_call.1} parent=1 // pred_check
      _
    $region59: #{tpu_custom_call.1} parent=1 // pred_check_branch
      %137 = sbr.rel (0) target = $region61
    $region60: #{tpu_custom_call.1} parent=1 // pred_region
      %138 = dma.done [#allocation6], 4096
    $region61: #{tpu_custom_call.1} parent=1 // pred_fallthru
      _
    // Predicated region
    $region62: #{tpu_custom_call.1} parent=1 // pred_check
      _
    $region63: #{tpu_custom_call.1} parent=1 // pred_check_branch
      %140 = sbr.rel (0) target = $region65
    $region64: #{tpu_custom_call.1} parent=1 // pred_region
      %141 = dma.done [#allocation9], 4096
    $region65: #{tpu_custom_call.1} parent=1 // pred_fallthru
      _
    // Predicated region
    $region66: #{tpu_custom_call.1} parent=1 // pred_check
      _
    $region67: #{tpu_custom_call.1} parent=1 // pred_check_branch
      %143 = sbr.rel (0) target = $region69
    $region68: #{tpu_custom_call.1} parent=1 // pred_region
      %144 = dma.done [#allocation9], 128
    $region69: #{tpu_custom_call.1} parent=1 // pred_fallthru
      _
    // Predicated region
    $region70: #{tpu_custom_call.1} parent=1 // pred_check
      _
    $region71: #{tpu_custom_call.1} parent=1 // pred_check_branch
      %146 = sbr.rel (0) target = $region73
    $region72: #{tpu_custom_call.1} parent=1 // pred_region
      %147 = dma.done [#allocation12], 256
    $region73: #{tpu_custom_call.1} parent=1 // pred_fallthru
      _
    // Predicated region
    $region74: #{tpu_custom_call.1} parent=1 // pred_check
      _
    $region75: #{tpu_custom_call.1} parent=1 // pred_check_branch
      %149 = sbr.rel (0) target = $region77
    $region76: #{tpu_custom_call.1} parent=1 // pred_region
      %150 = dma.done [#allocation12], 4096
    $region77: #{tpu_custom_call.1} parent=1 // pred_fallthru
      _
    // Predicated region
    $region78: #{tpu_custom_call.1} parent=1 // pred_check
      _
    $region79: #{tpu_custom_call.1} parent=1 // pred_check_branch
      %152 = sbr.rel (0) target = $region81
    $region80: #{tpu_custom_call.1} parent=1 // pred_region
      %153 = dma.done [#allocation15], 4096
    $region81: #{tpu_custom_call.1} parent=1 // pred_fallthru
      _
    %v156 = vld [vmem:[#allocation2] sm:$0xff]
    %v157 = vld [vmem:[#allocation2 + $0x8] sm:$0xff]
    %v158 = vld [vmem:[#allocation2 + $0x10] sm:$0xff]
    %v159 = vld [vmem:[#allocation2 + $0x18] sm:$0xff]
    %v160 = vpack.c.bf16 %v158, %v156
    %v161 = vpack.c.bf16 %v159, %v157
    %v162 = vld [vmem:[#allocation5] sm:$0xff]
    %v163 = vld [vmem:[#allocation5 + $0x8] sm:$0xff]
    %v164 = vld [vmem:[#allocation5 + $0x10] sm:$0xff]
    %v165 = vld [vmem:[#allocation5 + $0x18] sm:$0xff]
    %v166 = vld [vmem:[#allocation5 + $0x20] sm:$0xff]
    %v167 = vld [vmem:[#allocation5 + $0x28] sm:$0xff]
    %v168 = vld [vmem:[#allocation5 + $0x30] sm:$0xff]
    %v169 = vld [vmem:[#allocation5 + $0x38] sm:$0xff]
    %v170 = vld [vmem:[#allocation5 + $0x40] sm:$0xff]
    %v171 = vld [vmem:[#allocation5 + $0x48] sm:$0xff]
    %v172 = vld [vmem:[#allocation5 + $0x50] sm:$0xff]
    %v173 = vld [vmem:[#allocation5 + $0x58] sm:$0xff]
    %v174 = vld [vmem:[#allocation5 + $0x60] sm:$0xff]
    %v175 = vld [vmem:[#allocation5 + $0x68] sm:$0xff]
    %v176 = vld [vmem:[#allocation5 + $0x70] sm:$0xff]
    %v177 = vld [vmem:[#allocation5 + $0x78] sm:$0xff]
    %v178 = vld [vmem:[#allocation5 + $0x80] sm:$0xff]
    %v179 = vld [vmem:[#allocation5 + $0x88] sm:$0xff]
    %v180 = vld [vmem:[#allocation5 + $0x90] sm:$0xff]
    %v181 = vld [vmem:[#allocation5 + $0x98] sm:$0xff]
    %v182 = vld [vmem:[#allocation5 + $0xa0] sm:$0xff]
    %v183 = vld [vmem:[#allocation5 + $0xa8] sm:$0xff]
    %v184 = vld [vmem:[#allocation5 + $0xb0] sm:$0xff]
    %v185 = vld [vmem:[#allocation5 + $0xb8] sm:$0xff]
    %v186 = vld [vmem:[#allocation5 + $0xc0] sm:$0xff]
    %v187 = vld [vmem:[#allocation5 + $0xc8] sm:$0xff]
    %v188 = vld [vmem:[#allocation5 + $0xd0] sm:$0xff]
    %v189 = vld [vmem:[#allocation5 + $0xd8] sm:$0xff]
    %v190 = vld [vmem:[#allocation5 + $0xe0] sm:$0xff]
    %v191 = vld [vmem:[#allocation5 + $0xe8] sm:$0xff]
    %v192 = vld [vmem:[#allocation5 + $0xf0] sm:$0xff]
    %v193 = vld [vmem:[#allocation5 + $0xf8] sm:$0xff]
    %v194 = vld [vmem:[#allocation5 + $0x100] sm:$0xff]
    %v195 = vld [vmem:[#allocation5 + $0x108] sm:$0xff]
    %v196 = vld [vmem:[#allocation5 + $0x110] sm:$0xff]
    %v197 = vld [vmem:[#allocation5 + $0x118] sm:$0xff]
    %v198 = vld [vmem:[#allocation5 + $0x120] sm:$0xff]
    %v199 = vld [vmem:[#allocation5 + $0x128] sm:$0xff]
    %v200 = vld [vmem:[#allocation5 + $0x130] sm:$0xff]
    %v201 = vld [vmem:[#allocation5 + $0x138] sm:$0xff]
    %v202 = vld [vmem:[#allocation5 + $0x140] sm:$0xff]
    %v203 = vld [vmem:[#allocation5 + $0x148] sm:$0xff]
    %v204 = vld [vmem:[#allocation5 + $0x150] sm:$0xff]
    %v205 = vld [vmem:[#allocation5 + $0x158] sm:$0xff]
    %v206 = vld [vmem:[#allocation5 + $0x160] sm:$0xff]
    %v207 = vld [vmem:[#allocation5 + $0x168] sm:$0xff]
    %v208 = vld [vmem:[#allocation5 + $0x170] sm:$0xff]
    %v209 = vld [vmem:[#allocation5 + $0x178] sm:$0xff]
    %v210 = vld [vmem:[#allocation5 + $0x180] sm:$0xff]
    %v211 = vld [vmem:[#allocation5 + $0x188] sm:$0xff]
    %v212 = vld [vmem:[#allocation5 + $0x190] sm:$0xff]
    %v213 = vld [vmem:[#allocation5 + $0x198] sm:$0xff]
    %v214 = vld [vmem:[#allocation5 + $0x1a0] sm:$0xff]
    %v215 = vld [vmem:[#allocation5 + $0x1a8] sm:$0xff]
    %v216 = vld [vmem:[#allocation5 + $0x1b0] sm:$0xff]
    %v217 = vld [vmem:[#allocation5 + $0x1b8] sm:$0xff]
    %v218 = vld [vmem:[#allocation5 + $0x1c0] sm:$0xff]
    %v219 = vld [vmem:[#allocation5 + $0x1c8] sm:$0xff]
    %v220 = vld [vmem:[#allocation5 + $0x1d0] sm:$0xff]
    %v221 = vld [vmem:[#allocation5 + $0x1d8] sm:$0xff]
    %v222 = vld [vmem:[#allocation5 + $0x1e0] sm:$0xff]
    %v223 = vld [vmem:[#allocation5 + $0x1e8] sm:$0xff]
    %v224 = vld [vmem:[#allocation5 + $0x1f0] sm:$0xff]
    %v225 = vld [vmem:[#allocation5 + $0x1f8] sm:$0xff]
    %v226 = vld [vmem:[%s11] sm:$0xf]
    %v228 = vlaneseq
    %v229 = vshrl.u32 %v228, 7
    %v230 = vsub.s32 0, %v229
    %v231 = vrot.slane %v226, %v230
    %v232 = vlaneseq
    %v233 = vshrl.u32 %v232, 7
    %v234 = vsub.s32 1, %v233
    %v235 = vrot.slane %v226, %v234
    %v236 = vlaneseq
    %v237 = vshrl.u32 %v236, 7
    %v238 = vsub.s32 2, %v237
    %v239 = vrot.slane %v226, %v238
    %v240 = vlaneseq
    %v241 = vshrl.u32 %v240, 7
    %v242 = vsub.s32 3, %v241
    %v243 = vrot.slane %v226, %v242
    %v312 = vunpack.c.l.b16 %v162
    %v313 = vunpack.c.h.b16 %v162
    %v314 = vunpack.c.l.b16 %v163
    %v315 = vunpack.c.h.b16 %v163
    %v316 = vunpack.c.l.b16 %v164
    %v317 = vunpack.c.h.b16 %v164
    %v318 = vunpack.c.l.b16 %v165
    %v319 = vunpack.c.h.b16 %v165
    %v320 = vunpack.c.l.b16 %v166
    %v321 = vunpack.c.h.b16 %v166
    %v322 = vunpack.c.l.b16 %v167
    %v323 = vunpack.c.h.b16 %v167
    %v324 = vunpack.c.l.b16 %v168
    %v325 = vunpack.c.h.b16 %v168
    %v326 = vunpack.c.l.b16 %v169
    %v327 = vunpack.c.h.b16 %v169
    %v328 = vunpack.c.l.b16 %v170
    %v329 = vunpack.c.h.b16 %v170
    %v330 = vunpack.c.l.b16 %v171
    %v331 = vunpack.c.h.b16 %v171
    %v332 = vunpack.c.l.b16 %v172
    %v333 = vunpack.c.h.b16 %v172
    %v334 = vunpack.c.l.b16 %v173
    %v335 = vunpack.c.h.b16 %v173
    %v336 = vunpack.c.l.b16 %v174
    %v337 = vunpack.c.h.b16 %v174
    %v338 = vunpack.c.l.b16 %v175
    %v339 = vunpack.c.h.b16 %v175
    %v340 = vunpack.c.l.b16 %v176
    %v341 = vunpack.c.h.b16 %v176
    %v342 = vunpack.c.l.b16 %v177
    %v343 = vunpack.c.h.b16 %v177
    %v344 = vunpack.c.l.b16 %v178
    %v345 = vunpack.c.h.b16 %v178
    %v346 = vunpack.c.l.b16 %v179
    %v347 = vunpack.c.h.b16 %v179
    %v348 = vunpack.c.l.b16 %v180
    %v349 = vunpack.c.h.b16 %v180
    %v350 = vunpack.c.l.b16 %v181
    %v351 = vunpack.c.h.b16 %v181
    %v352 = vunpack.c.l.b16 %v182
    %v353 = vunpack.c.h.b16 %v182
    %v354 = vunpack.c.l.b16 %v183
    %v355 = vunpack.c.h.b16 %v183
    %v356 = vunpack.c.l.b16 %v184
    %v357 = vunpack.c.h.b16 %v184
    %v358 = vunpack.c.l.b16 %v185
    %v359 = vunpack.c.h.b16 %v185
    %v360 = vunpack.c.l.b16 %v186
    %v361 = vunpack.c.h.b16 %v186
    %v362 = vunpack.c.l.b16 %v187
    %v363 = vunpack.c.h.b16 %v187
    %v364 = vunpack.c.l.b16 %v188
    %v365 = vunpack.c.h.b16 %v188
    %v366 = vunpack.c.l.b16 %v189
    %v367 = vunpack.c.h.b16 %v189
    %v368 = vunpack.c.l.b16 %v190
    %v369 = vunpack.c.h.b16 %v190
    %v370 = vunpack.c.l.b16 %v191
    %v371 = vunpack.c.h.b16 %v191
    %v372 = vunpack.c.l.b16 %v192
    %v373 = vunpack.c.h.b16 %v192
    %v374 = vunpack.c.l.b16 %v193
    %v375 = vunpack.c.h.b16 %v193
    %v376 = vunpack.c.l.b16 %v194
    %v377 = vunpack.c.h.b16 %v194
    %v378 = vunpack.c.l.b16 %v195
    %v379 = vunpack.c.h.b16 %v195
    %v380 = vunpack.c.l.b16 %v196
    %v381 = vunpack.c.h.b16 %v196
    %v382 = vunpack.c.l.b16 %v197
    %v383 = vunpack.c.h.b16 %v197
    %v384 = vunpack.c.l.b16 %v198
    %v385 = vunpack.c.h.b16 %v198
    %v386 = vunpack.c.l.b16 %v199
    %v387 = vunpack.c.h.b16 %v199
    %v388 = vunpack.c.l.b16 %v200
    %v389 = vunpack.c.h.b16 %v200
    %v390 = vunpack.c.l.b16 %v201
    %v391 = vunpack.c.h.b16 %v201
    %v392 = vunpack.c.l.b16 %v202
    %v393 = vunpack.c.h.b16 %v202
    %v394 = vunpack.c.l.b16 %v203
    %v395 = vunpack.c.h.b16 %v203
    %v396 = vunpack.c.l.b16 %v204
    %v397 = vunpack.c.h.b16 %v204
    %v398 = vunpack.c.l.b16 %v205
    %v399 = vunpack.c.h.b16 %v205
    %v400 = vunpack.c.l.b16 %v206
    %v401 = vunpack.c.h.b16 %v206
    %v402 = vunpack.c.l.b16 %v207
    %v403 = vunpack.c.h.b16 %v207
    %v404 = vunpack.c.l.b16 %v208
    %v405 = vunpack.c.h.b16 %v208
    %v406 = vunpack.c.l.b16 %v209
    %v407 = vunpack.c.h.b16 %v209
    %v408 = vunpack.c.l.b16 %v210
    %v409 = vunpack.c.h.b16 %v210
    %v410 = vunpack.c.l.b16 %v211
    %v411 = vunpack.c.h.b16 %v211
    %v412 = vunpack.c.l.b16 %v212
    %v413 = vunpack.c.h.b16 %v212
    %v414 = vunpack.c.l.b16 %v213
    %v415 = vunpack.c.h.b16 %v213
    %v416 = vunpack.c.l.b16 %v214
    %v417 = vunpack.c.h.b16 %v214
    %v418 = vunpack.c.l.b16 %v215
    %v419 = vunpack.c.h.b16 %v215
    %v420 = vunpack.c.l.b16 %v216
    %v421 = vunpack.c.h.b16 %v216
    %v422 = vunpack.c.l.b16 %v217
    %v423 = vunpack.c.h.b16 %v217
    %v424 = vunpack.c.l.b16 %v218
    %v425 = vunpack.c.h.b16 %v218
    %v426 = vunpack.c.l.b16 %v219
    %v427 = vunpack.c.h.b16 %v219
    %v428 = vunpack.c.l.b16 %v220
    %v429 = vunpack.c.h.b16 %v220
    %v430 = vunpack.c.l.b16 %v221
    %v431 = vunpack.c.h.b16 %v221
    %v432 = vunpack.c.l.b16 %v222
    %v433 = vunpack.c.h.b16 %v222
    %v434 = vunpack.c.l.b16 %v223
    %v435 = vunpack.c.h.b16 %v223
    %v436 = vunpack.c.l.b16 %v224
    %v437 = vunpack.c.h.b16 %v224
    %v438 = vunpack.c.l.b16 %v225
    %v439 = vunpack.c.h.b16 %v225
    %v440 = vpack.c.b16 %v316, %v312
    %v441 = vpack.c.b16 %v317, %v313
    %v442 = vpack.c.b16 %v318, %v314
    %v443 = vpack.c.b16 %v319, %v315
    %v444 = vpack.c.b16 %v324, %v320
    %v445 = vpack.c.b16 %v325, %v321
    %v446 = vpack.c.b16 %v326, %v322
    %v447 = vpack.c.b16 %v327, %v323
    %v448 = vpack.c.b16 %v332, %v328
    %v449 = vpack.c.b16 %v333, %v329
    %v450 = vpack.c.b16 %v334, %v330
    %v451 = vpack.c.b16 %v335, %v331
    %v452 = vpack.c.b16 %v340, %v336
    %v453 = vpack.c.b16 %v341, %v337
    %v454 = vpack.c.b16 %v342, %v338
    %v455 = vpack.c.b16 %v343, %v339
    %v456 = vpack.c.b16 %v348, %v344
    %v457 = vpack.c.b16 %v349, %v345
    %v458 = vpack.c.b16 %v350, %v346
    %v459 = vpack.c.b16 %v351, %v347
    %v460 = vpack.c.b16 %v356, %v352
    %v461 = vpack.c.b16 %v357, %v353
    %v462 = vpack.c.b16 %v358, %v354
    %v463 = vpack.c.b16 %v359, %v355
    %v464 = vpack.c.b16 %v364, %v360
    %v465 = vpack.c.b16 %v365, %v361
    %v466 = vpack.c.b16 %v366, %v362
    %v467 = vpack.c.b16 %v367, %v363
    %v468 = vpack.c.b16 %v372, %v368
    %v469 = vpack.c.b16 %v373, %v369
    %v470 = vpack.c.b16 %v374, %v370
    %v471 = vpack.c.b16 %v375, %v371
    %v472 = vpack.c.b16 %v380, %v376
    %v473 = vpack.c.b16 %v381, %v377
    %v474 = vpack.c.b16 %v382, %v378
    %v475 = vpack.c.b16 %v383, %v379
    %v476 = vpack.c.b16 %v388, %v384
    %v477 = vpack.c.b16 %v389, %v385
    %v478 = vpack.c.b16 %v390, %v386
    %v479 = vpack.c.b16 %v391, %v387
    %v480 = vpack.c.b16 %v396, %v392
    %v481 = vpack.c.b16 %v397, %v393
    %v482 = vpack.c.b16 %v398, %v394
    %v483 = vpack.c.b16 %v399, %v395
    %v484 = vpack.c.b16 %v404, %v400
    %v485 = vpack.c.b16 %v405, %v401
    %v486 = vpack.c.b16 %v406, %v402
    %v487 = vpack.c.b16 %v407, %v403
    %v488 = vpack.c.b16 %v412, %v408
    %v489 = vpack.c.b16 %v413, %v409
    %v490 = vpack.c.b16 %v414, %v410
    %v491 = vpack.c.b16 %v415, %v411
    %v492 = vpack.c.b16 %v420, %v416
    %v493 = vpack.c.b16 %v421, %v417
    %v494 = vpack.c.b16 %v422, %v418
    %v495 = vpack.c.b16 %v423, %v419
    %v496 = vpack.c.b16 %v428, %v424
    %v497 = vpack.c.b16 %v429, %v425
    %v498 = vpack.c.b16 %v430, %v426
    %v499 = vpack.c.b16 %v431, %v427
    %v500 = vpack.c.b16 %v436, %v432
    %v501 = vpack.c.b16 %v437, %v433
    %v502 = vpack.c.b16 %v438, %v434
    %v503 = vpack.c.b16 %v439, %v435
    %568 = vmatprep.subr.bf16.mxu0 %v469
    %569 = vmatpush1.bf16.msra.mxu0 %v468
    %570 = vmatprep.subr.bf16.mxu0 %v465
    %571 = vmatpush1.bf16.msra.mxu0 %v464
    %572 = vmatprep.subr.bf16.mxu0 %v461
    %573 = vmatpush1.bf16.msra.mxu0 %v460
    %574 = vmatprep.subr.bf16.mxu0 %v457
    %575 = vmatpush1.bf16.msra.mxu0 %v456
    %576 = vmatprep.subr.bf16.mxu0 %v453
    %577 = vmatpush1.bf16.msra.mxu0 %v452
    %578 = vmatprep.subr.bf16.mxu0 %v449
    %579 = vmatpush1.bf16.msra.mxu0 %v448
    %580 = vmatprep.subr.bf16.mxu0 %v445
    %581 = vmatpush1.bf16.msra.mxu0 %v444
    %582 = vmatprep.subr.bf16.mxu0 %v441
    %583 = vmatpush1.bf16.msra.mxu0 %v440
    %584 = vmatprep.subr.bf16.mxu0 %v501
    %585 = vmatpush2.bf16.msra.mxu0 %v500
    %586 = vmatprep.subr.bf16.mxu0 %v497
    %587 = vmatpush2.bf16.msra.mxu0 %v496
    %588 = vmatprep.subr.bf16.mxu0 %v493
    %589 = vmatpush2.bf16.msra.mxu0 %v492
    %590 = vmatprep.subr.bf16.mxu0 %v489
    %591 = vmatpush2.bf16.msra.mxu0 %v488
    %592 = vmatprep.subr.bf16.mxu0 %v485
    %593 = vmatpush2.bf16.msra.mxu0 %v484
    %594 = vmatprep.subr.bf16.mxu0 %v481
    %595 = vmatpush2.bf16.msra.mxu0 %v480
    %596 = vmatprep.subr.bf16.mxu0 %v477
    %597 = vmatpush2.bf16.msra.mxu0 %v476
    %598 = vmatprep.subr.bf16.mxu0 %v473
    %599 = vmatpush2.bf16.msra.mxu0 %v472
    %600 = vmatprep.mubr.bf16.mxu0 %v161
    %601 = vmatmul.mubr.bf16.gmra.mxu0 %v160
    %v602 = vpop.f32.mrf.mxu0
    %v603 = vadd.f32 %v231, %v602
    %v604 = vpop.f32.mrf.mxu0
    %v605 = vadd.f32 %v235, %v604
    %v606 = vpop.f32.mrf.mxu0
    %v607 = vadd.f32 %v231, %v606
    %v608 = vpop.f32.mrf.mxu0
    %v609 = vadd.f32 %v235, %v608
    %610 = vdwg.mxu0
    %611 = vmatprep.subr.bf16.mxu0 %v471
    %612 = vmatpush1.bf16.msra.mxu0 %v470
    %613 = vmatprep.subr.bf16.mxu0 %v467
    %614 = vmatpush1.bf16.msra.mxu0 %v466
    %615 = vmatprep.subr.bf16.mxu0 %v463
    %616 = vmatpush1.bf16.msra.mxu0 %v462
    %617 = vmatprep.subr.bf16.mxu0 %v459
    %618 = vmatpush1.bf16.msra.mxu0 %v458
    %619 = vmatprep.subr.bf16.mxu0 %v455
    %620 = vmatpush1.bf16.msra.mxu0 %v454
    %621 = vmatprep.subr.bf16.mxu0 %v451
    %622 = vmatpush1.bf16.msra.mxu0 %v450
    %623 = vmatprep.subr.bf16.mxu0 %v447
    %624 = vmatpush1.bf16.msra.mxu0 %v446
    %625 = vmatprep.subr.bf16.mxu0 %v443
    %626 = vmatpush1.bf16.msra.mxu0 %v442
    %627 = vmatprep.subr.bf16.mxu0 %v503
    %628 = vmatpush2.bf16.msra.mxu0 %v502
    %629 = vmatprep.subr.bf16.mxu0 %v499
    %630 = vmatpush2.bf16.msra.mxu0 %v498
    %631 = vmatprep.subr.bf16.mxu0 %v495
    %632 = vmatpush2.bf16.msra.mxu0 %v494
    %633 = vmatprep.subr.bf16.mxu0 %v491
    %634 = vmatpush2.bf16.msra.mxu0 %v490
    %635 = vmatprep.subr.bf16.mxu0 %v487
    %636 = vmatpush2.bf16.msra.mxu0 %v486
    %637 = vmatprep.subr.bf16.mxu0 %v483
    %638 = vmatpush2.bf16.msra.mxu0 %v482
    %639 = vmatprep.subr.bf16.mxu0 %v479
    %640 = vmatpush2.bf16.msra.mxu0 %v478
    %641 = vmatprep.subr.bf16.mxu0 %v475
    %642 = vmatpush2.bf16.msra.mxu0 %v474
    %643 = vmatprep.mubr.bf16.mxu0 %v161
    %644 = vmatmul.mubr.bf16.gmra.mxu0 %v160
    %v645 = vpop.f32.mrf.mxu0
    %v646 = vadd.f32 %v239, %v645
    %v647 = vpop.f32.mrf.mxu0
    %v648 = vadd.f32 %v243, %v647
    %v649 = vpop.f32.mrf.mxu0
    %v650 = vadd.f32 %v239, %v649
    %v651 = vpop.f32.mrf.mxu0
    %v652 = vadd.f32 %v243, %v651
    %653 = vdwg.mxu0
    %v654 = vpack.c.bf16 %v607, %v603
    %v655 = vpack.c.bf16 %v609, %v605
    %vm656 = vcmp.ge.bf16.partialorder %v654, 0
    %vm657 = vcmp.ge.bf16.partialorder %v655, 0
    %v658 = vmul.bf16 %v654, 1009007652
    %v659 = vmul.bf16 %v655, 1009007652
    %v660 = vsel %vm656, %v654, %v658
    %v661 = vsel %vm657, %v655, %v659
    %v662 = vpack.c.bf16 %v650, %v646
    %v663 = vpack.c.bf16 %v652, %v648
    %v664 = vld [vmem:[#allocation7] sm:$0xff]
    %v665 = vld [vmem:[#allocation7 + $0x8] sm:$0xff]
    %v666 = vld [vmem:[#allocation7 + $0x10] sm:$0xff]
    %v667 = vld [vmem:[#allocation7 + $0x18] sm:$0xff]
    %v668 = vld [vmem:[#allocation7 + $0x20] sm:$0xff]
    %v669 = vld [vmem:[#allocation7 + $0x28] sm:$0xff]
    %v670 = vld [vmem:[#allocation7 + $0x30] sm:$0xff]
    %v671 = vld [vmem:[#allocation7 + $0x38] sm:$0xff]
    %v672 = vld [vmem:[#allocation7 + $0x40] sm:$0xff]
    %v673 = vld [vmem:[#allocation7 + $0x48] sm:$0xff]
    %v674 = vld [vmem:[#allocation7 + $0x50] sm:$0xff]
    %v675 = vld [vmem:[#allocation7 + $0x58] sm:$0xff]
    %v676 = vld [vmem:[#allocation7 + $0x60] sm:$0xff]
    %v677 = vld [vmem:[#allocation7 + $0x68] sm:$0xff]
    %v678 = vld [vmem:[#allocation7 + $0x70] sm:$0xff]
    %v679 = vld [vmem:[#allocation7 + $0x78] sm:$0xff]
    %v680 = vld [vmem:[#allocation7 + $0x80] sm:$0xff]
    %v681 = vld [vmem:[#allocation7 + $0x88] sm:$0xff]
    %v682 = vld [vmem:[#allocation7 + $0x90] sm:$0xff]
    %v683 = vld [vmem:[#allocation7 + $0x98] sm:$0xff]
    %v684 = vld [vmem:[#allocation7 + $0xa0] sm:$0xff]
    %v685 = vld [vmem:[#allocation7 + $0xa8] sm:$0xff]
    %v686 = vld [vmem:[#allocation7 + $0xb0] sm:$0xff]
    %v687 = vld [vmem:[#allocation7 + $0xb8] sm:$0xff]
    %v688 = vld [vmem:[#allocation7 + $0xc0] sm:$0xff]
    %v689 = vld [vmem:[#allocation7 + $0xc8] sm:$0xff]
    %v690 = vld [vmem:[#allocation7 + $0xd0] sm:$0xff]
    %v691 = vld [vmem:[#allocation7 + $0xd8] sm:$0xff]
    %v692 = vld [vmem:[#allocation7 + $0xe0] sm:$0xff]
    %v693 = vld [vmem:[#allocation7 + $0xe8] sm:$0xff]
    %v694 = vld [vmem:[#allocation7 + $0xf0] sm:$0xff]
    %v695 = vld [vmem:[#allocation7 + $0xf8] sm:$0xff]
    %v696 = vld [vmem:[%s11 + $0x4] sm:$0x3]
    %v698 = vlaneseq
    %v699 = vshrl.u32 %v698, 7
    %v700 = vsub.s32 0, %v699
    %v701 = vrot.slane %v696, %v700
    %v702 = vlaneseq
    %v703 = vshrl.u32 %v702, 7
    %v704 = vsub.s32 1, %v703
    %v705 = vrot.slane %v696, %v704
    %v740 = vunpack.c.l.b16 %v664
    %v741 = vunpack.c.h.b16 %v664
    %v742 = vunpack.c.l.b16 %v665
    %v743 = vunpack.c.h.b16 %v665
    %v744 = vunpack.c.l.b16 %v666
    %v745 = vunpack.c.h.b16 %v666
    %v746 = vunpack.c.l.b16 %v667
    %v747 = vunpack.c.h.b16 %v667
    %v748 = vunpack.c.l.b16 %v668
    %v749 = vunpack.c.h.b16 %v668
    %v750 = vunpack.c.l.b16 %v669
    %v751 = vunpack.c.h.b16 %v669
    %v752 = vunpack.c.l.b16 %v670
    %v753 = vunpack.c.h.b16 %v670
    %v754 = vunpack.c.l.b16 %v671
    %v755 = vunpack.c.h.b16 %v671
    %v756 = vunpack.c.l.b16 %v672
    %v757 = vunpack.c.h.b16 %v672
    %v758 = vunpack.c.l.b16 %v673
    %v759 = vunpack.c.h.b16 %v673
    %v760 = vunpack.c.l.b16 %v674
    %v761 = vunpack.c.h.b16 %v674
    %v762 = vunpack.c.l.b16 %v675
    %v763 = vunpack.c.h.b16 %v675
    %v764 = vunpack.c.l.b16 %v676
    %v765 = vunpack.c.h.b16 %v676
    %v766 = vunpack.c.l.b16 %v677
    %v767 = vunpack.c.h.b16 %v677
    %v768 = vunpack.c.l.b16 %v678
    %v769 = vunpack.c.h.b16 %v678
    %v770 = vunpack.c.l.b16 %v679
    %v771 = vunpack.c.h.b16 %v679
    %v772 = vunpack.c.l.b16 %v680
    %v773 = vunpack.c.h.b16 %v680
    %v774 = vunpack.c.l.b16 %v681
    %v775 = vunpack.c.h.b16 %v681
    %v776 = vunpack.c.l.b16 %v682
    %v777 = vunpack.c.h.b16 %v682
    %v778 = vunpack.c.l.b16 %v683
    %v779 = vunpack.c.h.b16 %v683
    %v780 = vunpack.c.l.b16 %v684
    %v781 = vunpack.c.h.b16 %v684
    %v782 = vunpack.c.l.b16 %v685
    %v783 = vunpack.c.h.b16 %v685
    %v784 = vunpack.c.l.b16 %v686
    %v785 = vunpack.c.h.b16 %v686
    %v786 = vunpack.c.l.b16 %v687
    %v787 = vunpack.c.h.b16 %v687
    %v788 = vunpack.c.l.b16 %v688
    %v789 = vunpack.c.h.b16 %v688
    %v790 = vunpack.c.l.b16 %v689
    %v791 = vunpack.c.h.b16 %v689
    %v792 = vunpack.c.l.b16 %v690
    %v793 = vunpack.c.h.b16 %v690
    %v794 = vunpack.c.l.b16 %v691
    %v795 = vunpack.c.h.b16 %v691
    %v796 = vunpack.c.l.b16 %v692
    %v797 = vunpack.c.h.b16 %v692
    %v798 = vunpack.c.l.b16 %v693
    %v799 = vunpack.c.h.b16 %v693
    %v800 = vunpack.c.l.b16 %v694
    %v801 = vunpack.c.h.b16 %v694
    %v802 = vunpack.c.l.b16 %v695
    %v803 = vunpack.c.h.b16 %v695
    %v804 = vpack.c.b16 %v742, %v740
    %v805 = vpack.c.b16 %v743, %v741
    %v806 = vpack.c.b16 %v746, %v744
    %v807 = vpack.c.b16 %v747, %v745
    %v808 = vpack.c.b16 %v750, %v748
    %v809 = vpack.c.b16 %v751, %v749
    %v810 = vpack.c.b16 %v754, %v752
    %v811 = vpack.c.b16 %v755, %v753
    %v812 = vpack.c.b16 %v758, %v756
    %v813 = vpack.c.b16 %v759, %v757
    %v814 = vpack.c.b16 %v762, %v760
    %v815 = vpack.c.b16 %v763, %v761
    %v816 = vpack.c.b16 %v766, %v764
    %v817 = vpack.c.b16 %v767, %v765
    %v818 = vpack.c.b16 %v770, %v768
    %v819 = vpack.c.b16 %v771, %v769
    %v820 = vpack.c.b16 %v774, %v772
    %v821 = vpack.c.b16 %v775, %v773
    %v822 = vpack.c.b16 %v778, %v776
    %v823 = vpack.c.b16 %v779, %v777
    %v824 = vpack.c.b16 %v782, %v780
    %v825 = vpack.c.b16 %v783, %v781
    %v826 = vpack.c.b16 %v786, %v784
    %v827 = vpack.c.b16 %v787, %v785
    %v828 = vpack.c.b16 %v790, %v788
    %v829 = vpack.c.b16 %v791, %v789
    %v830 = vpack.c.b16 %v794, %v792
    %v831 = vpack.c.b16 %v795, %v793
    %v832 = vpack.c.b16 %v798, %v796
    %v833 = vpack.c.b16 %v799, %v797
    %v834 = vpack.c.b16 %v802, %v800
    %v835 = vpack.c.b16 %v803, %v801
    %868 = vmatprep.subr.bf16.mxu0 %v819
    %869 = vmatpush1.bf16.msra.mxu0 %v818
    %870 = vmatprep.subr.bf16.mxu0 %v817
    %871 = vmatpush1.bf16.msra.mxu0 %v816
    %872 = vmatprep.subr.bf16.mxu0 %v815
    %873 = vmatpush1.bf16.msra.mxu0 %v814
    %874 = vmatprep.subr.bf16.mxu0 %v813
    %875 = vmatpush1.bf16.msra.mxu0 %v812
    %876 = vmatprep.subr.bf16.mxu0 %v811
    %877 = vmatpush1.bf16.msra.mxu0 %v810
    %878 = vmatprep.subr.bf16.mxu0 %v809
    %879 = vmatpush1.bf16.msra.mxu0 %v808
    %880 = vmatprep.subr.bf16.mxu0 %v807
    %881 = vmatpush1.bf16.msra.mxu0 %v806
    %882 = vmatprep.subr.bf16.mxu0 %v805
    %883 = vmatpush1.bf16.msra.mxu0 %v804
    %884 = vmatprep.subr.bf16.mxu0 %v835
    %885 = vmatpush2.bf16.msra.mxu0 %v834
    %886 = vmatprep.subr.bf16.mxu0 %v833
    %887 = vmatpush2.bf16.msra.mxu0 %v832
    %888 = vmatprep.subr.bf16.mxu0 %v831
    %889 = vmatpush2.bf16.msra.mxu0 %v830
    %890 = vmatprep.subr.bf16.mxu0 %v829
    %891 = vmatpush2.bf16.msra.mxu0 %v828
    %892 = vmatprep.subr.bf16.mxu0 %v827
    %893 = vmatpush2.bf16.msra.mxu0 %v826
    %894 = vmatprep.subr.bf16.mxu0 %v825
    %895 = vmatpush2.bf16.msra.mxu0 %v824
    %896 = vmatprep.subr.bf16.mxu0 %v823
    %897 = vmatpush2.bf16.msra.mxu0 %v822
    %898 = vmatprep.subr.bf16.mxu0 %v821
    %899 = vmatpush2.bf16.msra.mxu0 %v820
    %900 = vmatprep.mubr.bf16.mxu0 %v661
    %901 = vmatmul.mubr.bf16.gmra.mxu0 %v660
    %v902 = vpop.f32.mrf.mxu0
    %v903 = vadd.f32 %v701, %v902
    %v904 = vpop.f32.mrf.mxu0
    %v905 = vadd.f32 %v705, %v904
    %v906 = vpop.f32.mrf.mxu0
    %v907 = vadd.f32 %v701, %v906
    %v908 = vpop.f32.mrf.mxu0
    %v909 = vadd.f32 %v705, %v908
    %910 = vdwg.mxu0
    %v911 = vpack.c.bf16 %v907, %v903
    %v912 = vpack.c.bf16 %v909, %v905
    %vm913 = vcmp.ge.bf16.partialorder %v911, 0
    %vm914 = vcmp.ge.bf16.partialorder %v912, 0
    %v915 = vmul.bf16 %v911, 1009007652
    %v916 = vmul.bf16 %v912, 1009007652
    %v917 = vsel %vm913, %v911, %v915
    %v918 = vsel %vm914, %v912, %v916
    %v919 = vld [vmem:[#allocation8] sm:$0xff]
    %v920 = vld [vmem:[#allocation8 + $0x8] sm:$0xff]
    %v921 = vld [vmem:[#allocation8 + $0x10] sm:$0xff]
    %v922 = vld [vmem:[#allocation8 + $0x18] sm:$0xff]
    %v923 = vld [vmem:[#allocation8 + $0x20] sm:$0xff]
    %v924 = vld [vmem:[#allocation8 + $0x28] sm:$0xff]
    %v925 = vld [vmem:[#allocation8 + $0x30] sm:$0xff]
    %v926 = vld [vmem:[#allocation8 + $0x38] sm:$0xff]
    %v927 = vld [vmem:[#allocation8 + $0x40] sm:$0xff]
    %v928 = vld [vmem:[#allocation8 + $0x48] sm:$0xff]
    %v929 = vld [vmem:[#allocation8 + $0x50] sm:$0xff]
    %v930 = vld [vmem:[#allocation8 + $0x58] sm:$0xff]
    %v931 = vld [vmem:[#allocation8 + $0x60] sm:$0xff]
    %v932 = vld [vmem:[#allocation8 + $0x68] sm:$0xff]
    %v933 = vld [vmem:[#allocation8 + $0x70] sm:$0xff]
    %v934 = vld [vmem:[#allocation8 + $0x78] sm:$0xff]
    %v935 = vld [vmem:[#allocation8 + $0x80] sm:$0xff]
    %v936 = vld [vmem:[#allocation8 + $0x88] sm:$0xff]
    %v937 = vld [vmem:[#allocation8 + $0x90] sm:$0xff]
    %v938 = vld [vmem:[#allocation8 + $0x98] sm:$0xff]
    %v939 = vld [vmem:[#allocation8 + $0xa0] sm:$0xff]
    %v940 = vld [vmem:[#allocation8 + $0xa8] sm:$0xff]
    %v941 = vld [vmem:[#allocation8 + $0xb0] sm:$0xff]
    %v942 = vld [vmem:[#allocation8 + $0xb8] sm:$0xff]
    %v943 = vld [vmem:[#allocation8 + $0xc0] sm:$0xff]
    %v944 = vld [vmem:[#allocation8 + $0xc8] sm:$0xff]
    %v945 = vld [vmem:[#allocation8 + $0xd0] sm:$0xff]
    %v946 = vld [vmem:[#allocation8 + $0xd8] sm:$0xff]
    %v947 = vld [vmem:[#allocation8 + $0xe0] sm:$0xff]
    %v948 = vld [vmem:[#allocation8 + $0xe8] sm:$0xff]
    %v949 = vld [vmem:[#allocation8 + $0xf0] sm:$0xff]
    %v950 = vld [vmem:[#allocation8 + $0xf8] sm:$0xff]
    %v951 = vld [vmem:[%s11 + $0x6] sm:$0x3]
    %v953 = vlaneseq
    %v954 = vshrl.u32 %v953, 7
    %v955 = vsub.s32 0, %v954
    %v956 = vrot.slane %v951, %v955
    %v957 = vlaneseq
    %v958 = vshrl.u32 %v957, 7
    %v959 = vsub.s32 1, %v958
    %v960 = vrot.slane %v951, %v959
    %v995 = vunpack.c.l.b16 %v919
    %v996 = vunpack.c.h.b16 %v919
    %v997 = vunpack.c.l.b16 %v920
    %v998 = vunpack.c.h.b16 %v920
    %v999 = vunpack.c.l.b16 %v921
    %v1000 = vunpack.c.h.b16 %v921
    %v1001 = vunpack.c.l.b16 %v922
    %v1002 = vunpack.c.h.b16 %v922
    %v1003 = vunpack.c.l.b16 %v923
    %v1004 = vunpack.c.h.b16 %v923
    %v1005 = vunpack.c.l.b16 %v924
    %v1006 = vunpack.c.h.b16 %v924
    %v1007 = vunpack.c.l.b16 %v925
    %v1008 = vunpack.c.h.b16 %v925
    %v1009 = vunpack.c.l.b16 %v926
    %v1010 = vunpack.c.h.b16 %v926
    %v1011 = vunpack.c.l.b16 %v927
    %v1012 = vunpack.c.h.b16 %v927
    %v1013 = vunpack.c.l.b16 %v928
    %v1014 = vunpack.c.h.b16 %v928
    %v1015 = vunpack.c.l.b16 %v929
    %v1016 = vunpack.c.h.b16 %v929
    %v1017 = vunpack.c.l.b16 %v930
    %v1018 = vunpack.c.h.b16 %v930
    %v1019 = vunpack.c.l.b16 %v931
    %v1020 = vunpack.c.h.b16 %v931
    %v1021 = vunpack.c.l.b16 %v932
    %v1022 = vunpack.c.h.b16 %v932
    %v1023 = vunpack.c.l.b16 %v933
    %v1024 = vunpack.c.h.b16 %v933
    %v1025 = vunpack.c.l.b16 %v934
    %v1026 = vunpack.c.h.b16 %v934
    %v1027 = vunpack.c.l.b16 %v935
    %v1028 = vunpack.c.h.b16 %v935
    %v1029 = vunpack.c.l.b16 %v936
    %v1030 = vunpack.c.h.b16 %v936
    %v1031 = vunpack.c.l.b16 %v937
    %v1032 = vunpack.c.h.b16 %v937
    %v1033 = vunpack.c.l.b16 %v938
    %v1034 = vunpack.c.h.b16 %v938
    %v1035 = vunpack.c.l.b16 %v939
    %v1036 = vunpack.c.h.b16 %v939
    %v1037 = vunpack.c.l.b16 %v940
    %v1038 = vunpack.c.h.b16 %v940
    %v1039 = vunpack.c.l.b16 %v941
    %v1040 = vunpack.c.h.b16 %v941
    %v1041 = vunpack.c.l.b16 %v942
    %v1042 = vunpack.c.h.b16 %v942
    %v1043 = vunpack.c.l.b16 %v943
    %v1044 = vunpack.c.h.b16 %v943
    %v1045 = vunpack.c.l.b16 %v944
    %v1046 = vunpack.c.h.b16 %v944
    %v1047 = vunpack.c.l.b16 %v945
    %v1048 = vunpack.c.h.b16 %v945
    %v1049 = vunpack.c.l.b16 %v946
    %v1050 = vunpack.c.h.b16 %v946
    %v1051 = vunpack.c.l.b16 %v947
    %v1052 = vunpack.c.h.b16 %v947
    %v1053 = vunpack.c.l.b16 %v948
    %v1054 = vunpack.c.h.b16 %v948
    %v1055 = vunpack.c.l.b16 %v949
    %v1056 = vunpack.c.h.b16 %v949
    %v1057 = vunpack.c.l.b16 %v950
    %v1058 = vunpack.c.h.b16 %v950
    %v1059 = vpack.c.b16 %v997, %v995
    %v1060 = vpack.c.b16 %v998, %v996
    %v1061 = vpack.c.b16 %v1001, %v999
    %v1062 = vpack.c.b16 %v1002, %v1000
    %v1063 = vpack.c.b16 %v1005, %v1003
    %v1064 = vpack.c.b16 %v1006, %v1004
    %v1065 = vpack.c.b16 %v1009, %v1007
    %v1066 = vpack.c.b16 %v1010, %v1008
    %v1067 = vpack.c.b16 %v1013, %v1011
    %v1068 = vpack.c.b16 %v1014, %v1012
    %v1069 = vpack.c.b16 %v1017, %v1015
    %v1070 = vpack.c.b16 %v1018, %v1016
    %v1071 = vpack.c.b16 %v1021, %v1019
    %v1072 = vpack.c.b16 %v1022, %v1020
    %v1073 = vpack.c.b16 %v1025, %v1023
    %v1074 = vpack.c.b16 %v1026, %v1024
    %v1075 = vpack.c.b16 %v1029, %v1027
    %v1076 = vpack.c.b16 %v1030, %v1028
    %v1077 = vpack.c.b16 %v1033, %v1031
    %v1078 = vpack.c.b16 %v1034, %v1032
    %v1079 = vpack.c.b16 %v1037, %v1035
    %v1080 = vpack.c.b16 %v1038, %v1036
    %v1081 = vpack.c.b16 %v1041, %v1039
    %v1082 = vpack.c.b16 %v1042, %v1040
    %v1083 = vpack.c.b16 %v1045, %v1043
    %v1084 = vpack.c.b16 %v1046, %v1044
    %v1085 = vpack.c.b16 %v1049, %v1047
    %v1086 = vpack.c.b16 %v1050, %v1048
    %v1087 = vpack.c.b16 %v1053, %v1051
    %v1088 = vpack.c.b16 %v1054, %v1052
    %v1089 = vpack.c.b16 %v1057, %v1055
    %v1090 = vpack.c.b16 %v1058, %v1056
    %1123 = vmatprep.subr.bf16.mxu0 %v1074
    %1124 = vmatpush1.bf16.msra.mxu0 %v1073
    %1125 = vmatprep.subr.bf16.mxu0 %v1072
    %1126 = vmatpush1.bf16.msra.mxu0 %v1071
    %1127 = vmatprep.subr.bf16.mxu0 %v1070
    %1128 = vmatpush1.bf16.msra.mxu0 %v1069
    %1129 = vmatprep.subr.bf16.mxu0 %v1068
    %1130 = vmatpush1.bf16.msra.mxu0 %v1067
    %1131 = vmatprep.subr.bf16.mxu0 %v1066
    %1132 = vmatpush1.bf16.msra.mxu0 %v1065
    %1133 = vmatprep.subr.bf16.mxu0 %v1064
    %1134 = vmatpush1.bf16.msra.mxu0 %v1063
    %1135 = vmatprep.subr.bf16.mxu0 %v1062
    %1136 = vmatpush1.bf16.msra.mxu0 %v1061
    %1137 = vmatprep.subr.bf16.mxu0 %v1060
    %1138 = vmatpush1.bf16.msra.mxu0 %v1059
    %1139 = vmatprep.subr.bf16.mxu0 %v1090
    %1140 = vmatpush2.bf16.msra.mxu0 %v1089
    %1141 = vmatprep.subr.bf16.mxu0 %v1088
    %1142 = vmatpush2.bf16.msra.mxu0 %v1087
    %1143 = vmatprep.subr.bf16.mxu0 %v1086
    %1144 = vmatpush2.bf16.msra.mxu0 %v1085
    %1145 = vmatprep.subr.bf16.mxu0 %v1084
    %1146 = vmatpush2.bf16.msra.mxu0 %v1083
    %1147 = vmatprep.subr.bf16.mxu0 %v1082
    %1148 = vmatpush2.bf16.msra.mxu0 %v1081
    %1149 = vmatprep.subr.bf16.mxu0 %v1080
    %1150 = vmatpush2.bf16.msra.mxu0 %v1079
    %1151 = vmatprep.subr.bf16.mxu0 %v1078
    %1152 = vmatpush2.bf16.msra.mxu0 %v1077
    %1153 = vmatprep.subr.bf16.mxu0 %v1076
    %1154 = vmatpush2.bf16.msra.mxu0 %v1075
    %1155 = vmatprep.mubr.bf16.mxu0 %v663
    %1156 = vmatmul.mubr.bf16.gmra.mxu0 %v662
    %v1157 = vpop.f32.mrf.mxu0
    %v1158 = vadd.f32 %v956, %v1157
    %v1159 = vpop.f32.mrf.mxu0
    %v1160 = vadd.f32 %v960, %v1159
    %v1161 = vpop.f32.mrf.mxu0
    %v1162 = vadd.f32 %v956, %v1161
    %v1163 = vpop.f32.mrf.mxu0
    %v1164 = vadd.f32 %v960, %v1163
    %1165 = vdwg.mxu0
    %v1166 = vpack.c.bf16 %v1162, %v1158
    %v1167 = vpack.c.bf16 %v1164, %v1160
    %vm1168 = vcmp.ge.bf16.partialorder %v1166, 0
    %vm1169 = vcmp.ge.bf16.partialorder %v1167, 0
    %v1170 = vmul.bf16 %v1166, 1009007652
    %v1171 = vmul.bf16 %v1167, 1009007652
    %v1172 = vsel %vm1168, %v1166, %v1170
    %v1173 = vsel %vm1169, %v1167, %v1171
    %v1174 = vld [vmem:[%s5] sm:$0xf]
    %v1175 = vld [vmem:[%s5 + $0x4] sm:$0xf]
    %v1176 = vld [vmem:[%s5 + $0x8] sm:$0xf]
    %v1177 = vld [vmem:[%s5 + $0xc] sm:$0xf]
    %v1178 = vld [vmem:[%s5 + $0x10] sm:$0xf]
    %v1179 = vld [vmem:[%s5 + $0x14] sm:$0xf]
    %v1180 = vld [vmem:[%s5 + $0x18] sm:$0xf]
    %v1181 = vld [vmem:[%s5 + $0x1c] sm:$0xf]
    %v1182 = vld [vmem:[%s5 + $0x20] sm:$0xf]
    %v1183 = vld [vmem:[%s5 + $0x24] sm:$0xf]
    %v1184 = vld [vmem:[%s5 + $0x28] sm:$0xf]
    %v1185 = vld [vmem:[%s5 + $0x2c] sm:$0xf]
    %v1186 = vld [vmem:[%s5 + $0x30] sm:$0xf]
    %v1187 = vld [vmem:[%s5 + $0x34] sm:$0xf]
    %v1188 = vld [vmem:[%s5 + $0x38] sm:$0xf]
    %v1189 = vld [vmem:[%s5 + $0x3c] sm:$0xf]
    %v1190 = vld [vmem:[%s5 + $0x40] sm:$0xf]
    %v1191 = vld [vmem:[%s5 + $0x44] sm:$0xf]
    %v1192 = vld [vmem:[%s5 + $0x48] sm:$0xf]
    %v1193 = vld [vmem:[%s5 + $0x4c] sm:$0xf]
    %v1194 = vld [vmem:[%s5 + $0x50] sm:$0xf]
    %v1195 = vld [vmem:[%s5 + $0x54] sm:$0xf]
    %v1196 = vld [vmem:[%s5 + $0x58] sm:$0xf]
    %v1197 = vld [vmem:[%s5 + $0x5c] sm:$0xf]
    %v1198 = vld [vmem:[%s5 + $0x60] sm:$0xf]
    %v1199 = vld [vmem:[%s5 + $0x64] sm:$0xf]
    %v1200 = vld [vmem:[%s5 + $0x68] sm:$0xf]
    %v1201 = vld [vmem:[%s5 + $0x6c] sm:$0xf]
    %v1202 = vld [vmem:[%s5 + $0x70] sm:$0xf]
    %v1203 = vld [vmem:[%s5 + $0x74] sm:$0xf]
    %v1204 = vld [vmem:[%s5 + $0x78] sm:$0xf]
    %v1205 = vld [vmem:[%s5 + $0x7c] sm:$0xf]
    %v1206 = vld [vmem:[%s11 + $0x8] sm:$0x1]
    %v1208 = vlaneseq
    %v1209 = vshrl.u32 %v1208, 7
    %v1210 = vsub.s32 0, %v1209
    %v1211 = vrot.slane %v1206, %v1210
    %v1245 = vunpack.c.l.b16 %v1174
    %v1246 = vunpack.c.l.b16 %v1175
    %v1247 = vunpack.c.l.b16 %v1176
    %v1248 = vunpack.c.l.b16 %v1177
    %v1249 = vunpack.c.l.b16 %v1178
    %v1250 = vunpack.c.l.b16 %v1179
    %v1251 = vunpack.c.l.b16 %v1180
    %v1252 = vunpack.c.l.b16 %v1181
    %v1253 = vunpack.c.l.b16 %v1182
    %v1254 = vunpack.c.l.b16 %v1183
    %v1255 = vunpack.c.l.b16 %v1184
    %v1256 = vunpack.c.l.b16 %v1185
    %v1257 = vunpack.c.l.b16 %v1186
    %v1258 = vunpack.c.l.b16 %v1187
    %v1259 = vunpack.c.l.b16 %v1188
    %v1260 = vunpack.c.l.b16 %v1189
    %v1261 = vunpack.c.l.b16 %v1190
    %v1262 = vunpack.c.l.b16 %v1191
    %v1263 = vunpack.c.l.b16 %v1192
    %v1264 = vunpack.c.l.b16 %v1193
    %v1265 = vunpack.c.l.b16 %v1194
    %v1266 = vunpack.c.l.b16 %v1195
    %v1267 = vunpack.c.l.b16 %v1196
    %v1268 = vunpack.c.l.b16 %v1197
    %v1269 = vunpack.c.l.b16 %v1198
    %v1270 = vunpack.c.l.b16 %v1199
    %v1271 = vunpack.c.l.b16 %v1200
    %v1272 = vunpack.c.l.b16 %v1201
    %v1273 = vunpack.c.l.b16 %v1202
    %v1274 = vunpack.c.l.b16 %v1203
    %v1275 = vunpack.c.l.b16 %v1204
    %v1276 = vunpack.c.l.b16 %v1205
    %v1277 = vpack.c.b16 %v1246, %v1245
    %v1278 = vpack.c.b16 %v1248, %v1247
    %v1279 = vpack.c.b16 %v1250, %v1249
    %v1280 = vpack.c.b16 %v1252, %v1251
    %v1281 = vpack.c.b16 %v1254, %v1253
    %v1282 = vpack.c.b16 %v1256, %v1255
    %v1283 = vpack.c.b16 %v1258, %v1257
    %v1284 = vpack.c.b16 %v1260, %v1259
    %v1285 = vpack.c.b16 %v1262, %v1261
    %v1286 = vpack.c.b16 %v1264, %v1263
    %v1287 = vpack.c.b16 %v1266, %v1265
    %v1288 = vpack.c.b16 %v1268, %v1267
    %v1289 = vpack.c.b16 %v1270, %v1269
    %v1290 = vpack.c.b16 %v1272, %v1271
    %v1291 = vpack.c.b16 %v1274, %v1273
    %v1292 = vpack.c.b16 %v1276, %v1275
    %1309 = vmatprep.subr.bf16.mxu0 0
    %1310 = vmatpush1.bf16.msra.mxu0 %v1284
    %1311 = vmatprep.subr.bf16.mxu0 0
    %1312 = vmatpush1.bf16.msra.mxu0 %v1283
    %1313 = vmatprep.subr.bf16.mxu0 0
    %1314 = vmatpush1.bf16.msra.mxu0 %v1282
    %1315 = vmatprep.subr.bf16.mxu0 0
    %1316 = vmatpush1.bf16.msra.mxu0 %v1281
    %1317 = vmatprep.subr.bf16.mxu0 0
    %1318 = vmatpush1.bf16.msra.mxu0 %v1280
    %1319 = vmatprep.subr.bf16.mxu0 0
    %1320 = vmatpush1.bf16.msra.mxu0 %v1279
    %1321 = vmatprep.subr.bf16.mxu0 0
    %1322 = vmatpush1.bf16.msra.mxu0 %v1278
    %1323 = vmatprep.subr.bf16.mxu0 0
    %1324 = vmatpush1.bf16.msra.mxu0 %v1277
    %1325 = vmatprep.subr.bf16.mxu0 0
    %1326 = vmatpush2.bf16.msra.mxu0 %v1292
    %1327 = vmatprep.subr.bf16.mxu0 0
    %1328 = vmatpush2.bf16.msra.mxu0 %v1291
    %1329 = vmatprep.subr.bf16.mxu0 0
    %1330 = vmatpush2.bf16.msra.mxu0 %v1290
    %1331 = vmatprep.subr.bf16.mxu0 0
    %1332 = vmatpush2.bf16.msra.mxu0 %v1289
    %1333 = vmatprep.subr.bf16.mxu0 0
    %1334 = vmatpush2.bf16.msra.mxu0 %v1288
    %1335 = vmatprep.subr.bf16.mxu0 0
    %1336 = vmatpush2.bf16.msra.mxu0 %v1287
    %1337 = vmatprep.subr.bf16.mxu0 0
    %1338 = vmatpush2.bf16.msra.mxu0 %v1286
    %1339 = vmatprep.subr.bf16.mxu0 0
    %1340 = vmatpush2.bf16.msra.mxu0 %v1285
    %1341 = vmatprep.mubr.bf16.mxu0 %v1173
    %1342 = vmatmul.mubr.bf16.gmra.mxu0 %v1172
    %v1343 = vpop.f32.mrf.mxu0
    %v1344 = vadd.f32 %v1211, %v1343
    %v1345 = vpop.f32.mrf.mxu0
    %v1346 = vpop.f32.mrf.mxu0
    %v1347 = vadd.f32 %v1211, %v1346
    %v1348 = vpop.f32.mrf.mxu0
    %1349 = vdwg.mxu0
    %vm1350 = vcmask 130048
    %v1351 = vsel %vm1350, %v1344, -inf
    %1352 = vmax.xlane.f32.xlu0 %v1351
    %v1353 = vpop.xlane.xlu0 %1352
    %v1354 = vsel %vm1350, %v1347, -inf
    %1355 = vmax.xlane.f32.xlu0 %v1354
    %v1356 = vpop.xlane.xlu0 %1355
    %v1357 = vsub.f32 %v1344, %v1353
    %v1358 = vsub.f32 %v1347, %v1356
    %v1359 = vmul.f32 %v1357, 1.442695
    %v1360 = vpow.pop %v1359
    %v1361 = vmul.f32 %v1358, 1.442695
    %v1362 = vpow.pop %v1361
    %v1363 = vsel %vm1350, %v1360, 0.0
    %1364 = vadd.xlane.f32.xlu0 %v1363
    %v1365 = vpop.xlane.xlu0 %1364
    %v1366 = vsel %vm1350, %v1362, 0.0
    %1367 = vadd.xlane.f32.xlu0 %v1366
    %v1368 = vpop.xlane.xlu0 %1367
    %v1369 = vrcp.pop %v1365
    %v1370 = vrcp.pop %v1368
    %v1371 = vmul.f32 %v1360, %v1369
    %v1372 = vmul.f32 %v1362, %v1370
    %v1373 = vld [vmem:[%s6] sm:$0xf]
    %v1374 = vld [vmem:[%s6 + $0x4] sm:$0xf]
    %v1375 = vld [vmem:[%s6 + $0x8] sm:$0xf]
    %v1376 = vld [vmem:[%s6 + $0xc] sm:$0xf]
    %v1377 = vld [vmem:[%s6 + $0x10] sm:$0xf]
    %v1378 = vld [vmem:[%s6 + $0x14] sm:$0xf]
    %v1379 = vld [vmem:[%s6 + $0x18] sm:$0xf]
    %v1380 = vld [vmem:[%s6 + $0x1c] sm:$0xf]
    %v1381 = vld [vmem:[%s6 + $0x20] sm:$0xf]
    %v1382 = vld [vmem:[%s6 + $0x24] sm:$0xf]
    %v1383 = vld [vmem:[%s6 + $0x28] sm:$0xf]
    %v1384 = vld [vmem:[%s6 + $0x2c] sm:$0xf]
    %v1385 = vld [vmem:[%s6 + $0x30] sm:$0xf]
    %v1386 = vld [vmem:[%s6 + $0x34] sm:$0xf]
    %v1387 = vld [vmem:[%s6 + $0x38] sm:$0xf]
    %v1388 = vld [vmem:[%s6 + $0x3c] sm:$0xf]
    %v1389 = vld [vmem:[%s6 + $0x40] sm:$0xf]
    %v1390 = vld [vmem:[%s6 + $0x44] sm:$0xf]
    %v1391 = vld [vmem:[%s6 + $0x48] sm:$0xf]
    %v1392 = vld [vmem:[%s6 + $0x4c] sm:$0xf]
    %v1393 = vld [vmem:[%s6 + $0x50] sm:$0xf]
    %v1394 = vld [vmem:[%s6 + $0x54] sm:$0xf]
    %v1395 = vld [vmem:[%s6 + $0x58] sm:$0xf]
    %v1396 = vld [vmem:[%s6 + $0x5c] sm:$0xf]
    %v1397 = vld [vmem:[%s6 + $0x60] sm:$0xf]
    %v1398 = vld [vmem:[%s6 + $0x64] sm:$0xf]
    %v1399 = vld [vmem:[%s6 + $0x68] sm:$0xf]
    %v1400 = vld [vmem:[%s6 + $0x6c] sm:$0xf]
    %v1401 = vld [vmem:[%s6 + $0x70] sm:$0xf]
    %v1402 = vld [vmem:[%s6 + $0x74] sm:$0xf]
    %v1403 = vld [vmem:[%s6 + $0x78] sm:$0xf]
    %v1404 = vld [vmem:[%s6 + $0x7c] sm:$0xf]
    %v1405 = vpack.c.bf16 %v1372, %v1371
    %v1406 = vld [vmem:[#allocation10] sm:$0xf]
    %v1407 = vld [vmem:[#allocation10 + $0x4] sm:$0xf]
    %v1410 = vunpack.c.l.b16 %v1406
    %v1411 = vunpack.c.l.b16 %v1407
    %v1412 = vpack.c.b16 %v1411, %v1410
    %v1415 = vsel %vm1350, %v1405, 0
    %1417 = vmatprep.subr.bf16.mxu0 0
    %1418 = vmatpush1.bf16.msra.mxu0 0
    %1419 = vmatprep.subr.bf16.mxu0 0
    %1420 = vmatpush1.bf16.msra.mxu0 0
    %1421 = vmatprep.subr.bf16.mxu0 0
    %1422 = vmatpush1.bf16.msra.mxu0 0
    %1423 = vmatprep.subr.bf16.mxu0 0
    %1424 = vmatpush1.bf16.msra.mxu0 0
    %1425 = vmatprep.subr.bf16.mxu0 0
    %1426 = vmatpush1.bf16.msra.mxu0 0
    %1427 = vmatprep.subr.bf16.mxu0 0
    %1428 = vmatpush1.bf16.msra.mxu0 0
    %1429 = vmatprep.subr.bf16.mxu0 0
    %1430 = vmatpush1.bf16.msra.mxu0 0
    %1431 = vmatprep.subr.bf16.mxu0 0
    %1432 = vmatpush1.bf16.msra.mxu0 %v1412
    %1433 = vmatprep.subr.bf16.mxu0 0
    %1434 = vmatpush2.bf16.msra.mxu0 0
    %1435 = vmatprep.subr.bf16.mxu0 0
    %1436 = vmatpush2.bf16.msra.mxu0 0
    %1437 = vmatprep.subr.bf16.mxu0 0
    %1438 = vmatpush2.bf16.msra.mxu0 0
    %1439 = vmatprep.subr.bf16.mxu0 0
    %1440 = vmatpush2.bf16.msra.mxu0 0
    %1441 = vmatprep.subr.bf16.mxu0 0
    %1442 = vmatpush2.bf16.msra.mxu0 0
    %1443 = vmatprep.subr.bf16.mxu0 0
    %1444 = vmatpush2.bf16.msra.mxu0 0
    %1445 = vmatprep.subr.bf16.mxu0 0
    %1446 = vmatpush2.bf16.msra.mxu0 0
    %1447 = vmatprep.subr.bf16.mxu0 0
    %1448 = vmatpush2.bf16.msra.mxu0 0
    %1449 = vmatprep.mubr.bf16.mxu0 0
    %1450 = vmatmul.mubr.bf16.gmra.mxu0 %v1415
    %v1451 = vpop.f32.mrf.mxu0
    %v1452 = vadd.f32 0.0, %v1451
    %v1453 = vpop.f32.mrf.mxu0
    %v1454 = vpop.f32.mrf.mxu0
    %v1455 = vadd.f32 0.0, %v1454
    %v1456 = vpop.f32.mrf.mxu0
    %1457 = vdwg.mxu0
    %v1490 = vunpack.c.l.b16 %v1373
    %v1491 = vunpack.c.l.b16 %v1374
    %v1492 = vunpack.c.l.b16 %v1375
    %v1493 = vunpack.c.l.b16 %v1376
    %v1494 = vunpack.c.l.b16 %v1377
    %v1495 = vunpack.c.l.b16 %v1378
    %v1496 = vunpack.c.l.b16 %v1379
    %v1497 = vunpack.c.l.b16 %v1380
    %v1498 = vunpack.c.l.b16 %v1381
    %v1499 = vunpack.c.l.b16 %v1382
    %v1500 = vunpack.c.l.b16 %v1383
    %v1501 = vunpack.c.l.b16 %v1384
    %v1502 = vunpack.c.l.b16 %v1385
    %v1503 = vunpack.c.l.b16 %v1386
    %v1504 = vunpack.c.l.b16 %v1387
    %v1505 = vunpack.c.l.b16 %v1388
    %v1506 = vunpack.c.l.b16 %v1389
    %v1507 = vunpack.c.l.b16 %v1390
    %v1508 = vunpack.c.l.b16 %v1391
    %v1509 = vunpack.c.l.b16 %v1392
    %v1510 = vunpack.c.l.b16 %v1393
    %v1511 = vunpack.c.l.b16 %v1394
    %v1512 = vunpack.c.l.b16 %v1395
    %v1513 = vunpack.c.l.b16 %v1396
    %v1514 = vunpack.c.l.b16 %v1397
    %v1515 = vunpack.c.l.b16 %v1398
    %v1516 = vunpack.c.l.b16 %v1399
    %v1517 = vunpack.c.l.b16 %v1400
    %v1518 = vunpack.c.l.b16 %v1401
    %v1519 = vunpack.c.l.b16 %v1402
    %v1520 = vunpack.c.l.b16 %v1403
    %v1521 = vunpack.c.l.b16 %v1404
    %v1522 = vpack.c.b16 %v1491, %v1490
    %v1523 = vpack.c.b16 %v1493, %v1492
    %v1524 = vpack.c.b16 %v1495, %v1494
    %v1525 = vpack.c.b16 %v1497, %v1496
    %v1526 = vpack.c.b16 %v1499, %v1498
    %v1527 = vpack.c.b16 %v1501, %v1500
    %v1528 = vpack.c.b16 %v1503, %v1502
    %v1529 = vpack.c.b16 %v1505, %v1504
    %v1530 = vpack.c.b16 %v1507, %v1506
    %v1531 = vpack.c.b16 %v1509, %v1508
    %v1532 = vpack.c.b16 %v1511, %v1510
    %v1533 = vpack.c.b16 %v1513, %v1512
    %v1534 = vpack.c.b16 %v1515, %v1514
    %v1535 = vpack.c.b16 %v1517, %v1516
    %v1536 = vpack.c.b16 %v1519, %v1518
    %v1537 = vpack.c.b16 %v1521, %v1520
    %1554 = vmatprep.subr.bf16.mxu0 0
    %1555 = vmatpush1.bf16.msra.mxu0 %v1529
    %1556 = vmatprep.subr.bf16.mxu0 0
    %1557 = vmatpush1.bf16.msra.mxu0 %v1528
    %1558 = vmatprep.subr.bf16.mxu0 0
    %1559 = vmatpush1.bf16.msra.mxu0 %v1527
    %1560 = vmatprep.subr.bf16.mxu0 0
    %1561 = vmatpush1.bf16.msra.mxu0 %v1526
    %1562 = vmatprep.subr.bf16.mxu0 0
    %1563 = vmatpush1.bf16.msra.mxu0 %v1525
    %1564 = vmatprep.subr.bf16.mxu0 0
    %1565 = vmatpush1.bf16.msra.mxu0 %v1524
    %1566 = vmatprep.subr.bf16.mxu0 0
    %1567 = vmatpush1.bf16.msra.mxu0 %v1523
    %1568 = vmatprep.subr.bf16.mxu0 0
    %1569 = vmatpush1.bf16.msra.mxu0 %v1522
    %1570 = vmatprep.subr.bf16.mxu0 0
    %1571 = vmatpush2.bf16.msra.mxu0 %v1537
    %1572 = vmatprep.subr.bf16.mxu0 0
    %1573 = vmatpush2.bf16.msra.mxu0 %v1536
    %1574 = vmatprep.subr.bf16.mxu0 0
    %1575 = vmatpush2.bf16.msra.mxu0 %v1535
    %1576 = vmatprep.subr.bf16.mxu0 0
    %1577 = vmatpush2.bf16.msra.mxu0 %v1534
    %1578 = vmatprep.subr.bf16.mxu0 0
    %1579 = vmatpush2.bf16.msra.mxu0 %v1533
    %1580 = vmatprep.subr.bf16.mxu0 0
    %1581 = vmatpush2.bf16.msra.mxu0 %v1532
    %1582 = vmatprep.subr.bf16.mxu0 0
    %1583 = vmatpush2.bf16.msra.mxu0 %v1531
    %1584 = vmatprep.subr.bf16.mxu0 0
    %1585 = vmatpush2.bf16.msra.mxu0 %v1530
    %1586 = vmatprep.mubr.bf16.mxu0 %v918
    %1587 = vmatmul.mubr.bf16.gmra.mxu0 %v917
    %v1588 = vpop.f32.mrf.mxu0
    %v1589 = vadd.f32 %v1452, %v1588
    %v1590 = vpop.f32.mrf.mxu0
    %v1591 = vpop.f32.mrf.mxu0
    %v1592 = vadd.f32 %v1455, %v1591
    %v1593 = vpop.f32.mrf.mxu0
    %1594 = vdwg.mxu0
    %v1595 = vld [vmem:[%s11 + $0x9] sm:$0x1]
    %v1597 = vlaneseq
    %v1598 = vshrl.u32 %v1597, 7
    %v1599 = vsub.s32 0, %v1598
    %v1600 = vrot.slane %v1595, %v1599
    %v1602 = vadd.f32 %v1589, %v1600
    %v1603 = vadd.f32 %v1592, %v1600
    %1604 = vst [vmem:[#allocation16] sm:$0xff] %v1602
    %1605 = vst [vmem:[#allocation16 + $0x8] sm:$0xff] %v1603
    %v1606 = vmul.f32 %v1602, 0.5
    %v1607 = vmul.f32 %v1603, 0.5
    %v1608 = vmul.f32 %v1606, 1.442695
    %v1609 = vpow.pop %v1608
    %v1610 = vmul.f32 %v1607, 1.442695
    %v1611 = vpow.pop %v1610
    %v1612 = vld [vmem:[%s1] sm:$0xff]
    %v1613 = vld [vmem:[%s1 + $0x8] sm:$0xff]
    %1616 = vrot.lane.b32.xlu0 %v1612, 16
    %v1617 = vpop.permute.xlu0 %1616
    %1618 = vrot.lane.b32.xlu0 %v1613, 16
    %v1619 = vpop.permute.xlu0 %1618
    %v1622 = vmul.f32 %v1609, %v1617
    %v1623 = vmul.f32 %v1611, %v1619
    %1626 = vrot.lane.b32.xlu0 %v1622, 112
    %v1627 = vpop.permute.xlu0 %1626
    %1628 = vrot.lane.b32.xlu0 %v1623, 112
    %v1629 = vpop.permute.xlu0 %1628
    %v1632 = vadd.f32 %v1602, %v1627
    %v1633 = vadd.f32 %v1603, %v1629
    %v1634 = vpack.c.bf16 %v1633, %v1632
    %v1635 = vld [vmem:[#allocation11] sm:$0xff]
    %v1636 = vld [vmem:[#allocation11 + $0x8] sm:$0xff]
    %v1637 = vld [vmem:[%s11 + $0xa] sm:$0x3]
    %v1639 = vlaneseq
    %v1640 = vshrl.u32 %v1639, 7
    %v1641 = vsub.s32 0, %v1640
    %v1642 = vrot.slane %v1637, %v1641
    %v1643 = vlaneseq
    %v1644 = vshrl.u32 %v1643, 7
    %v1645 = vsub.s32 1, %v1644
    %v1646 = vrot.slane %v1637, %v1645
    %v1651 = vunpack.c.l.b16 %v1635
    %v1652 = vunpack.c.h.b16 %v1635
    %v1653 = vunpack.c.l.b16 %v1636
    %v1654 = vunpack.c.h.b16 %v1636
    %v1655 = vpack.c.b16 %v1653, %v1651
    %v1656 = vpack.c.b16 %v1654, %v1652
    %v1660 = vsel %vm1350, %v1634, 0
    %1662 = vmatprep.subr.bf16.mxu0 0
    %1663 = vmatpush1.bf16.msra.mxu0 0
    %1664 = vmatprep.subr.bf16.mxu0 0
    %1665 = vmatpush1.bf16.msra.mxu0 0
    %1666 = vmatprep.subr.bf16.mxu0 0
    %1667 = vmatpush1.bf16.msra.mxu0 0
    %1668 = vmatprep.subr.bf16.mxu0 0
    %1669 = vmatpush1.bf16.msra.mxu0 0
    %1670 = vmatprep.subr.bf16.mxu0 0
    %1671 = vmatpush1.bf16.msra.mxu0 0
    %1672 = vmatprep.subr.bf16.mxu0 0
    %1673 = vmatpush1.bf16.msra.mxu0 0
    %1674 = vmatprep.subr.bf16.mxu0 0
    %1675 = vmatpush1.bf16.msra.mxu0 0
    %1676 = vmatprep.subr.bf16.mxu0 %v1656
    %1677 = vmatpush1.bf16.msra.mxu0 %v1655
    %1678 = vmatprep.subr.bf16.mxu0 0
    %1679 = vmatpush2.bf16.msra.mxu0 0
    %1680 = vmatprep.subr.bf16.mxu0 0
    %1681 = vmatpush2.bf16.msra.mxu0 0
    %1682 = vmatprep.subr.bf16.mxu0 0
    %1683 = vmatpush2.bf16.msra.mxu0 0
    %1684 = vmatprep.subr.bf16.mxu0 0
    %1685 = vmatpush2.bf16.msra.mxu0 0
    %1686 = vmatprep.subr.bf16.mxu0 0
    %1687 = vmatpush2.bf16.msra.mxu0 0
    %1688 = vmatprep.subr.bf16.mxu0 0
    %1689 = vmatpush2.bf16.msra.mxu0 0
    %1690 = vmatprep.subr.bf16.mxu0 0
    %1691 = vmatpush2.bf16.msra.mxu0 0
    %1692 = vmatprep.subr.bf16.mxu0 0
    %1693 = vmatpush2.bf16.msra.mxu0 0
    %1694 = vmatprep.mubr.bf16.mxu0 0
    %1695 = vmatmul.mubr.bf16.gmra.mxu0 %v1660
    %v1696 = vpop.f32.mrf.mxu0
    %v1697 = vadd.f32 %v1642, %v1696
    %v1698 = vpop.f32.mrf.mxu0
    %v1699 = vadd.f32 %v1646, %v1698
    %v1700 = vpop.f32.mrf.mxu0
    %v1701 = vadd.f32 %v1642, %v1700
    %v1702 = vpop.f32.mrf.mxu0
    %v1703 = vadd.f32 %v1646, %v1702
    %1704 = vdwg.mxu0
    %v1705 = vpack.c.bf16 %v1701, %v1697
    %v1706 = vpack.c.bf16 %v1703, %v1699
    %vm1707 = vcmp.ge.bf16.partialorder %v1705, 0
    %vm1708 = vcmp.ge.bf16.partialorder %v1706, 0
    %v1709 = vmul.bf16 %v1705, 1009007652
    %v1710 = vmul.bf16 %v1706, 1009007652
    %v1711 = vsel %vm1707, %v1705, %v1709
    %v1712 = vsel %vm1708, %v1706, %v1710
    %v1713 = vld [vmem:[#allocation13] sm:$0xff]
    %v1714 = vld [vmem:[#allocation13 + $0x8] sm:$0xff]
    %v1715 = vld [vmem:[#allocation13 + $0x10] sm:$0xff]
    %v1716 = vld [vmem:[#allocation13 + $0x18] sm:$0xff]
    %v1717 = vld [vmem:[#allocation13 + $0x20] sm:$0xff]
    %v1718 = vld [vmem:[#allocation13 + $0x28] sm:$0xff]
    %v1719 = vld [vmem:[#allocation13 + $0x30] sm:$0xff]
    %v1720 = vld [vmem:[#allocation13 + $0x38] sm:$0xff]
    %v1721 = vld [vmem:[#allocation13 + $0x40] sm:$0xff]
    %v1722 = vld [vmem:[#allocation13 + $0x48] sm:$0xff]
    %v1723 = vld [vmem:[#allocation13 + $0x50] sm:$0xff]
    %v1724 = vld [vmem:[#allocation13 + $0x58] sm:$0xff]
    %v1725 = vld [vmem:[#allocation13 + $0x60] sm:$0xff]
    %v1726 = vld [vmem:[#allocation13 + $0x68] sm:$0xff]
    %v1727 = vld [vmem:[#allocation13 + $0x70] sm:$0xff]
    %v1728 = vld [vmem:[#allocation13 + $0x78] sm:$0xff]
    %v1729 = vld [vmem:[#allocation13 + $0x80] sm:$0xff]
    %v1730 = vld [vmem:[#allocation13 + $0x88] sm:$0xff]
    %v1731 = vld [vmem:[#allocation13 + $0x90] sm:$0xff]
    %v1732 = vld [vmem:[#allocation13 + $0x98] sm:$0xff]
    %v1733 = vld [vmem:[#allocation13 + $0xa0] sm:$0xff]
    %v1734 = vld [vmem:[#allocation13 + $0xa8] sm:$0xff]
    %v1735 = vld [vmem:[#allocation13 + $0xb0] sm:$0xff]
    %v1736 = vld [vmem:[#allocation13 + $0xb8] sm:$0xff]
    %v1737 = vld [vmem:[#allocation13 + $0xc0] sm:$0xff]
    %v1738 = vld [vmem:[#allocation13 + $0xc8] sm:$0xff]
    %v1739 = vld [vmem:[#allocation13 + $0xd0] sm:$0xff]
    %v1740 = vld [vmem:[#allocation13 + $0xd8] sm:$0xff]
    %v1741 = vld [vmem:[#allocation13 + $0xe0] sm:$0xff]
    %v1742 = vld [vmem:[#allocation13 + $0xe8] sm:$0xff]
    %v1743 = vld [vmem:[#allocation13 + $0xf0] sm:$0xff]
    %v1744 = vld [vmem:[#allocation13 + $0xf8] sm:$0xff]
    %v1745 = vld [vmem:[%s11 + $0xc] sm:$0x3]
    %v1747 = vlaneseq
    %v1748 = vshrl.u32 %v1747, 7
    %v1749 = vsub.s32 0, %v1748
    %v1750 = vrot.slane %v1745, %v1749
    %v1751 = vlaneseq
    %v1752 = vshrl.u32 %v1751, 7
    %v1753 = vsub.s32 1, %v1752
    %v1754 = vrot.slane %v1745, %v1753
    %v1789 = vunpack.c.l.b16 %v1713
    %v1790 = vunpack.c.h.b16 %v1713
    %v1791 = vunpack.c.l.b16 %v1714
    %v1792 = vunpack.c.h.b16 %v1714
    %v1793 = vunpack.c.l.b16 %v1715
    %v1794 = vunpack.c.h.b16 %v1715
    %v1795 = vunpack.c.l.b16 %v1716
    %v1796 = vunpack.c.h.b16 %v1716
    %v1797 = vunpack.c.l.b16 %v1717
    %v1798 = vunpack.c.h.b16 %v1717
    %v1799 = vunpack.c.l.b16 %v1718
    %v1800 = vunpack.c.h.b16 %v1718
    %v1801 = vunpack.c.l.b16 %v1719
    %v1802 = vunpack.c.h.b16 %v1719
    %v1803 = vunpack.c.l.b16 %v1720
    %v1804 = vunpack.c.h.b16 %v1720
    %v1805 = vunpack.c.l.b16 %v1721
    %v1806 = vunpack.c.h.b16 %v1721
    %v1807 = vunpack.c.l.b16 %v1722
    %v1808 = vunpack.c.h.b16 %v1722
    %v1809 = vunpack.c.l.b16 %v1723
    %v1810 = vunpack.c.h.b16 %v1723
    %v1811 = vunpack.c.l.b16 %v1724
    %v1812 = vunpack.c.h.b16 %v1724
    %v1813 = vunpack.c.l.b16 %v1725
    %v1814 = vunpack.c.h.b16 %v1725
    %v1815 = vunpack.c.l.b16 %v1726
    %v1816 = vunpack.c.h.b16 %v1726
    %v1817 = vunpack.c.l.b16 %v1727
    %v1818 = vunpack.c.h.b16 %v1727
    %v1819 = vunpack.c.l.b16 %v1728
    %v1820 = vunpack.c.h.b16 %v1728
    %v1821 = vunpack.c.l.b16 %v1729
    %v1822 = vunpack.c.h.b16 %v1729
    %v1823 = vunpack.c.l.b16 %v1730
    %v1824 = vunpack.c.h.b16 %v1730
    %v1825 = vunpack.c.l.b16 %v1731
    %v1826 = vunpack.c.h.b16 %v1731
    %v1827 = vunpack.c.l.b16 %v1732
    %v1828 = vunpack.c.h.b16 %v1732
    %v1829 = vunpack.c.l.b16 %v1733
    %v1830 = vunpack.c.h.b16 %v1733
    %v1831 = vunpack.c.l.b16 %v1734
    %v1832 = vunpack.c.h.b16 %v1734
    %v1833 = vunpack.c.l.b16 %v1735
    %v1834 = vunpack.c.h.b16 %v1735
    %v1835 = vunpack.c.l.b16 %v1736
    %v1836 = vunpack.c.h.b16 %v1736
    %v1837 = vunpack.c.l.b16 %v1737
    %v1838 = vunpack.c.h.b16 %v1737
    %v1839 = vunpack.c.l.b16 %v1738
    %v1840 = vunpack.c.h.b16 %v1738
    %v1841 = vunpack.c.l.b16 %v1739
    %v1842 = vunpack.c.h.b16 %v1739
    %v1843 = vunpack.c.l.b16 %v1740
    %v1844 = vunpack.c.h.b16 %v1740
    %v1845 = vunpack.c.l.b16 %v1741
    %v1846 = vunpack.c.h.b16 %v1741
    %v1847 = vunpack.c.l.b16 %v1742
    %v1848 = vunpack.c.h.b16 %v1742
    %v1849 = vunpack.c.l.b16 %v1743
    %v1850 = vunpack.c.h.b16 %v1743
    %v1851 = vunpack.c.l.b16 %v1744
    %v1852 = vunpack.c.h.b16 %v1744
    %v1853 = vpack.c.b16 %v1791, %v1789
    %v1854 = vpack.c.b16 %v1792, %v1790
    %v1855 = vpack.c.b16 %v1795, %v1793
    %v1856 = vpack.c.b16 %v1796, %v1794
    %v1857 = vpack.c.b16 %v1799, %v1797
    %v1858 = vpack.c.b16 %v1800, %v1798
    %v1859 = vpack.c.b16 %v1803, %v1801
    %v1860 = vpack.c.b16 %v1804, %v1802
    %v1861 = vpack.c.b16 %v1807, %v1805
    %v1862 = vpack.c.b16 %v1808, %v1806
    %v1863 = vpack.c.b16 %v1811, %v1809
    %v1864 = vpack.c.b16 %v1812, %v1810
    %v1865 = vpack.c.b16 %v1815, %v1813
    %v1866 = vpack.c.b16 %v1816, %v1814
    %v1867 = vpack.c.b16 %v1819, %v1817
    %v1868 = vpack.c.b16 %v1820, %v1818
    %v1869 = vpack.c.b16 %v1823, %v1821
    %v1870 = vpack.c.b16 %v1824, %v1822
    %v1871 = vpack.c.b16 %v1827, %v1825
    %v1872 = vpack.c.b16 %v1828, %v1826
    %v1873 = vpack.c.b16 %v1831, %v1829
    %v1874 = vpack.c.b16 %v1832, %v1830
    %v1875 = vpack.c.b16 %v1835, %v1833
    %v1876 = vpack.c.b16 %v1836, %v1834
    %v1877 = vpack.c.b16 %v1839, %v1837
    %v1878 = vpack.c.b16 %v1840, %v1838
    %v1879 = vpack.c.b16 %v1843, %v1841
    %v1880 = vpack.c.b16 %v1844, %v1842
    %v1881 = vpack.c.b16 %v1847, %v1845
    %v1882 = vpack.c.b16 %v1848, %v1846
    %v1883 = vpack.c.b16 %v1851, %v1849
    %v1884 = vpack.c.b16 %v1852, %v1850
    %1917 = vmatprep.subr.bf16.mxu0 %v1868
    %1918 = vmatpush1.bf16.msra.mxu0 %v1867
    %1919 = vmatprep.subr.bf16.mxu0 %v1866
    %1920 = vmatpush1.bf16.msra.mxu0 %v1865
    %1921 = vmatprep.subr.bf16.mxu0 %v1864
    %1922 = vmatpush1.bf16.msra.mxu0 %v1863
    %1923 = vmatprep.subr.bf16.mxu0 %v1862
    %1924 = vmatpush1.bf16.msra.mxu0 %v1861
    %1925 = vmatprep.subr.bf16.mxu0 %v1860
    %1926 = vmatpush1.bf16.msra.mxu0 %v1859
    %1927 = vmatprep.subr.bf16.mxu0 %v1858
    %1928 = vmatpush1.bf16.msra.mxu0 %v1857
    %1929 = vmatprep.subr.bf16.mxu0 %v1856
    %1930 = vmatpush1.bf16.msra.mxu0 %v1855
    %1931 = vmatprep.subr.bf16.mxu0 %v1854
    %1932 = vmatpush1.bf16.msra.mxu0 %v1853
    %1933 = vmatprep.subr.bf16.mxu0 %v1884
    %1934 = vmatpush2.bf16.msra.mxu0 %v1883
    %1935 = vmatprep.subr.bf16.mxu0 %v1882
    %1936 = vmatpush2.bf16.msra.mxu0 %v1881
    %1937 = vmatprep.subr.bf16.mxu0 %v1880
    %1938 = vmatpush2.bf16.msra.mxu0 %v1879
    %1939 = vmatprep.subr.bf16.mxu0 %v1878
    %1940 = vmatpush2.bf16.msra.mxu0 %v1877
    %1941 = vmatprep.subr.bf16.mxu0 %v1876
    %1942 = vmatpush2.bf16.msra.mxu0 %v1875
    %1943 = vmatprep.subr.bf16.mxu0 %v1874
    %1944 = vmatpush2.bf16.msra.mxu0 %v1873
    %1945 = vmatprep.subr.bf16.mxu0 %v1872
    %1946 = vmatpush2.bf16.msra.mxu0 %v1871
    %1947 = vmatprep.subr.bf16.mxu0 %v1870
    %1948 = vmatpush2.bf16.msra.mxu0 %v1869
    %1949 = vmatprep.mubr.bf16.mxu0 %v1712
    %1950 = vmatmul.mubr.bf16.gmra.mxu0 %v1711
    %v1951 = vpop.f32.mrf.mxu0
    %v1952 = vadd.f32 %v1750, %v1951
    %v1953 = vpop.f32.mrf.mxu0
    %v1954 = vadd.f32 %v1754, %v1953
    %v1955 = vpop.f32.mrf.mxu0
    %v1956 = vadd.f32 %v1750, %v1955
    %v1957 = vpop.f32.mrf.mxu0
    %v1958 = vadd.f32 %v1754, %v1957
    %1959 = vdwg.mxu0
    %v1960 = vpack.c.bf16 %v1956, %v1952
    %v1961 = vpack.c.bf16 %v1958, %v1954
    %vm1962 = vcmp.ge.bf16.partialorder %v1960, 0
    %vm1963 = vcmp.ge.bf16.partialorder %v1961, 0
    %v1964 = vmul.bf16 %v1960, 1009007652
    %v1965 = vmul.bf16 %v1961, 1009007652
    %v1966 = vsel %vm1962, %v1960, %v1964
    %v1967 = vsel %vm1963, %v1961, %v1965
    %v1968 = vld [vmem:[#allocation14] sm:$0xff]
    %v1969 = vld [vmem:[#allocation14 + $0x8] sm:$0xff]
    %v1970 = vld [vmem:[#allocation14 + $0x10] sm:$0xff]
    %v1971 = vld [vmem:[#allocation14 + $0x18] sm:$0xff]
    %v1972 = vld [vmem:[#allocation14 + $0x20] sm:$0xff]
    %v1973 = vld [vmem:[#allocation14 + $0x28] sm:$0xff]
    %v1974 = vld [vmem:[#allocation14 + $0x30] sm:$0xff]
    %v1975 = vld [vmem:[#allocation14 + $0x38] sm:$0xff]
    %v1976 = vld [vmem:[#allocation14 + $0x40] sm:$0xff]
    %v1977 = vld [vmem:[#allocation14 + $0x48] sm:$0xff]
    %v1978 = vld [vmem:[#allocation14 + $0x50] sm:$0xff]
    %v1979 = vld [vmem:[#allocation14 + $0x58] sm:$0xff]
    %v1980 = vld [vmem:[#allocation14 + $0x60] sm:$0xff]
    %v1981 = vld [vmem:[#allocation14 + $0x68] sm:$0xff]
    %v1982 = vld [vmem:[#allocation14 + $0x70] sm:$0xff]
    %v1983 = vld [vmem:[#allocation14 + $0x78] sm:$0xff]
    %v1984 = vld [vmem:[#allocation14 + $0x80] sm:$0xff]
    %v1985 = vld [vmem:[#allocation14 + $0x88] sm:$0xff]
    %v1986 = vld [vmem:[#allocation14 + $0x90] sm:$0xff]
    %v1987 = vld [vmem:[#allocation14 + $0x98] sm:$0xff]
    %v1988 = vld [vmem:[#allocation14 + $0xa0] sm:$0xff]
    %v1989 = vld [vmem:[#allocation14 + $0xa8] sm:$0xff]
    %v1990 = vld [vmem:[#allocation14 + $0xb0] sm:$0xff]
    %v1991 = vld [vmem:[#allocation14 + $0xb8] sm:$0xff]
    %v1992 = vld [vmem:[#allocation14 + $0xc0] sm:$0xff]
    %v1993 = vld [vmem:[#allocation14 + $0xc8] sm:$0xff]
    %v1994 = vld [vmem:[#allocation14 + $0xd0] sm:$0xff]
    %v1995 = vld [vmem:[#allocation14 + $0xd8] sm:$0xff]
    %v1996 = vld [vmem:[#allocation14 + $0xe0] sm:$0xff]
    %v1997 = vld [vmem:[#allocation14 + $0xe8] sm:$0xff]
    %v1998 = vld [vmem:[#allocation14 + $0xf0] sm:$0xff]
    %v1999 = vld [vmem:[#allocation14 + $0xf8] sm:$0xff]
    %v2000 = vld [vmem:[%s11 + $0xe] sm:$0x3]
    %v2002 = vlaneseq
    %v2003 = vshrl.u32 %v2002, 7
    %v2004 = vsub.s32 0, %v2003
    %v2005 = vrot.slane %v2000, %v2004
    %v2006 = vlaneseq
    %v2007 = vshrl.u32 %v2006, 7
    %v2008 = vsub.s32 1, %v2007
    %v2009 = vrot.slane %v2000, %v2008
    %v2044 = vunpack.c.l.b16 %v1968
    %v2045 = vunpack.c.h.b16 %v1968
    %v2046 = vunpack.c.l.b16 %v1969
    %v2047 = vunpack.c.h.b16 %v1969
    %v2048 = vunpack.c.l.b16 %v1970
    %v2049 = vunpack.c.h.b16 %v1970
    %v2050 = vunpack.c.l.b16 %v1971
    %v2051 = vunpack.c.h.b16 %v1971
    %v2052 = vunpack.c.l.b16 %v1972
    %v2053 = vunpack.c.h.b16 %v1972
    %v2054 = vunpack.c.l.b16 %v1973
    %v2055 = vunpack.c.h.b16 %v1973
    %v2056 = vunpack.c.l.b16 %v1974
    %v2057 = vunpack.c.h.b16 %v1974
    %v2058 = vunpack.c.l.b16 %v1975
    %v2059 = vunpack.c.h.b16 %v1975
    %v2060 = vunpack.c.l.b16 %v1976
    %v2061 = vunpack.c.h.b16 %v1976
    %v2062 = vunpack.c.l.b16 %v1977
    %v2063 = vunpack.c.h.b16 %v1977
    %v2064 = vunpack.c.l.b16 %v1978
    %v2065 = vunpack.c.h.b16 %v1978
    %v2066 = vunpack.c.l.b16 %v1979
    %v2067 = vunpack.c.h.b16 %v1979
    %v2068 = vunpack.c.l.b16 %v1980
    %v2069 = vunpack.c.h.b16 %v1980
    %v2070 = vunpack.c.l.b16 %v1981
    %v2071 = vunpack.c.h.b16 %v1981
    %v2072 = vunpack.c.l.b16 %v1982
    %v2073 = vunpack.c.h.b16 %v1982
    %v2074 = vunpack.c.l.b16 %v1983
    %v2075 = vunpack.c.h.b16 %v1983
    %v2076 = vunpack.c.l.b16 %v1984
    %v2077 = vunpack.c.h.b16 %v1984
    %v2078 = vunpack.c.l.b16 %v1985
    %v2079 = vunpack.c.h.b16 %v1985
    %v2080 = vunpack.c.l.b16 %v1986
    %v2081 = vunpack.c.h.b16 %v1986
    %v2082 = vunpack.c.l.b16 %v1987
    %v2083 = vunpack.c.h.b16 %v1987
    %v2084 = vunpack.c.l.b16 %v1988
    %v2085 = vunpack.c.h.b16 %v1988
    %v2086 = vunpack.c.l.b16 %v1989
    %v2087 = vunpack.c.h.b16 %v1989
    %v2088 = vunpack.c.l.b16 %v1990
    %v2089 = vunpack.c.h.b16 %v1990
    %v2090 = vunpack.c.l.b16 %v1991
    %v2091 = vunpack.c.h.b16 %v1991
    %v2092 = vunpack.c.l.b16 %v1992
    %v2093 = vunpack.c.h.b16 %v1992
    %v2094 = vunpack.c.l.b16 %v1993
    %v2095 = vunpack.c.h.b16 %v1993
    %v2096 = vunpack.c.l.b16 %v1994
    %v2097 = vunpack.c.h.b16 %v1994
    %v2098 = vunpack.c.l.b16 %v1995
    %v2099 = vunpack.c.h.b16 %v1995
    %v2100 = vunpack.c.l.b16 %v1996
    %v2101 = vunpack.c.h.b16 %v1996
    %v2102 = vunpack.c.l.b16 %v1997
    %v2103 = vunpack.c.h.b16 %v1997
    %v2104 = vunpack.c.l.b16 %v1998
    %v2105 = vunpack.c.h.b16 %v1998
    %v2106 = vunpack.c.l.b16 %v1999
    %v2107 = vunpack.c.h.b16 %v1999
    %v2108 = vpack.c.b16 %v2046, %v2044
    %v2109 = vpack.c.b16 %v2047, %v2045
    %v2110 = vpack.c.b16 %v2050, %v2048
    %v2111 = vpack.c.b16 %v2051, %v2049
    %v2112 = vpack.c.b16 %v2054, %v2052
    %v2113 = vpack.c.b16 %v2055, %v2053
    %v2114 = vpack.c.b16 %v2058, %v2056
    %v2115 = vpack.c.b16 %v2059, %v2057
    %v2116 = vpack.c.b16 %v2062, %v2060
    %v2117 = vpack.c.b16 %v2063, %v2061
    %v2118 = vpack.c.b16 %v2066, %v2064
    %v2119 = vpack.c.b16 %v2067, %v2065
    %v2120 = vpack.c.b16 %v2070, %v2068
    %v2121 = vpack.c.b16 %v2071, %v2069
    %v2122 = vpack.c.b16 %v2074, %v2072
    %v2123 = vpack.c.b16 %v2075, %v2073
    %v2124 = vpack.c.b16 %v2078, %v2076
    %v2125 = vpack.c.b16 %v2079, %v2077
    %v2126 = vpack.c.b16 %v2082, %v2080
    %v2127 = vpack.c.b16 %v2083, %v2081
    %v2128 = vpack.c.b16 %v2086, %v2084
    %v2129 = vpack.c.b16 %v2087, %v2085
    %v2130 = vpack.c.b16 %v2090, %v2088
    %v2131 = vpack.c.b16 %v2091, %v2089
    %v2132 = vpack.c.b16 %v2094, %v2092
    %v2133 = vpack.c.b16 %v2095, %v2093
    %v2134 = vpack.c.b16 %v2098, %v2096
    %v2135 = vpack.c.b16 %v2099, %v2097
    %v2136 = vpack.c.b16 %v2102, %v2100
    %v2137 = vpack.c.b16 %v2103, %v2101
    %v2138 = vpack.c.b16 %v2106, %v2104
    %v2139 = vpack.c.b16 %v2107, %v2105
    %2172 = vmatprep.subr.bf16.mxu0 %v2123
    %2173 = vmatpush1.bf16.msra.mxu0 %v2122
    %2174 = vmatprep.subr.bf16.mxu0 %v2121
    %2175 = vmatpush1.bf16.msra.mxu0 %v2120
    %2176 = vmatprep.subr.bf16.mxu0 %v2119
    %2177 = vmatpush1.bf16.msra.mxu0 %v2118
    %2178 = vmatprep.subr.bf16.mxu0 %v2117
    %2179 = vmatpush1.bf16.msra.mxu0 %v2116
    %2180 = vmatprep.subr.bf16.mxu0 %v2115
    %2181 = vmatpush1.bf16.msra.mxu0 %v2114
    %2182 = vmatprep.subr.bf16.mxu0 %v2113
    %2183 = vmatpush1.bf16.msra.mxu0 %v2112
    %2184 = vmatprep.subr.bf16.mxu0 %v2111
    %2185 = vmatpush1.bf16.msra.mxu0 %v2110
    %2186 = vmatprep.subr.bf16.mxu0 %v2109
    %2187 = vmatpush1.bf16.msra.mxu0 %v2108
    %2188 = vmatprep.subr.bf16.mxu0 %v2139
    %2189 = vmatpush2.bf16.msra.mxu0 %v2138
    %2190 = vmatprep.subr.bf16.mxu0 %v2137
    %2191 = vmatpush2.bf16.msra.mxu0 %v2136
    %2192 = vmatprep.subr.bf16.mxu0 %v2135
    %2193 = vmatpush2.bf16.msra.mxu0 %v2134
    %2194 = vmatprep.subr.bf16.mxu0 %v2133
    %2195 = vmatpush2.bf16.msra.mxu0 %v2132
    %2196 = vmatprep.subr.bf16.mxu0 %v2131
    %2197 = vmatpush2.bf16.msra.mxu0 %v2130
    %2198 = vmatprep.subr.bf16.mxu0 %v2129
    %2199 = vmatpush2.bf16.msra.mxu0 %v2128
    %2200 = vmatprep.subr.bf16.mxu0 %v2127
    %2201 = vmatpush2.bf16.msra.mxu0 %v2126
    %2202 = vmatprep.subr.bf16.mxu0 %v2125
    %2203 = vmatpush2.bf16.msra.mxu0 %v2124
    %2204 = vmatprep.mubr.bf16.mxu0 %v1967
    %2205 = vmatmul.mubr.bf16.gmra.mxu0 %v1966
    %v2206 = vpop.f32.mrf.mxu0
    %v2207 = vadd.f32 %v2005, %v2206
    %v2208 = vpop.f32.mrf.mxu0
    %v2209 = vadd.f32 %v2009, %v2208
    %v2210 = vpop.f32.mrf.mxu0
    %v2211 = vadd.f32 %v2005, %v2210
    %v2212 = vpop.f32.mrf.mxu0
    %v2213 = vadd.f32 %v2009, %v2212
    %2214 = vdwg.mxu0
    %v2215 = vsub.f32 0.0, %v2207
    %v2216 = vsub.f32 0.0, %v2209
    %v2217 = vsub.f32 0.0, %v2211
    %v2218 = vsub.f32 0.0, %v2213
    %v2219 = vmul.f32 %v2215, 1.442695
    %v2220 = vpow.pop %v2219
    %v2221 = vmul.f32 %v2216, 1.442695
    %v2222 = vpow.pop %v2221
    %v2223 = vmul.f32 %v2217, 1.442695
    %v2224 = vpow.pop %v2223
    %v2225 = vmul.f32 %v2218, 1.442695
    %v2226 = vpow.pop %v2225
    %v2227 = vadd.f32 %v2220, 1.0
    %v2228 = vadd.f32 %v2222, 1.0
    %v2229 = vadd.f32 %v2224, 1.0
    %v2230 = vadd.f32 %v2226, 1.0
    %v2231 = vrcp.pop %v2227
    %v2232 = vrcp.pop %v2228
    %v2233 = vrcp.pop %v2229
    %v2234 = vrcp.pop %v2230
    %v2235 = vpack.c.bf16 %v2233, %v2231
    %v2236 = vpack.c.bf16 %v2234, %v2232
    %v2239 = vunpack.c.l.b16 %v2235
    %v2240 = vunpack.c.l.b16 %v2236
    %v2241 = vunpack.c.h.b16 %v2235
    %v2242 = vunpack.c.h.b16 %v2236
    %v2243 = vpack.c.b16 %v2240, %v2239
    %v2244 = vpack.c.b16 %v2242, %v2241
    %2247 = vst [vmem:[#allocation17] sm:$0xff] %v2243
    %2248 = vst [vmem:[#allocation17 + $0x8] sm:$0xff] %v2244
    // Predicated region
    $region82: #{tpu_custom_call.1} parent=1 // pred_check
      _
    $region83: #{tpu_custom_call.1} parent=1 // pred_check_branch
      %2250 = sbr.rel (0) target = $region85
    $region84: #{tpu_custom_call.1} parent=1 // pred_region
      %s2252 = ssub.s32 256, 256
      %2253 = vsyncadd [#allocation4], %s2252
      %s2254 = sshll.u32 [#allocation16], 4
      %s2255 = int_to_ptr.vmem [resolvable:$true] %s2254
      %2260 = dma.vmem_to_hbm [thread:$0]  %s2255, 256, %s12, [#allocation4], 128, 128, 8
    $region85: #{tpu_custom_call.1} parent=1 // pred_fallthru
      _
    // Predicated region
    $region86: #{tpu_custom_call.1} parent=1 // pred_check
      _
    $region87: #{tpu_custom_call.1} parent=1 // pred_check_branch
      %2262 = sbr.rel (0) target = $region89
    $region88: #{tpu_custom_call.1} parent=1 // pred_region
      %s2264 = ssub.s32 256, 256
      %2265 = vsyncadd [#allocation18], %s2264
      %s2266 = sshll.u32 [#allocation17], 4
      %s2267 = int_to_ptr.vmem [resolvable:$true] %s2266
      %2272 = dma.vmem_to_hbm [thread:$0]  %s2267, 256, %s13, [#allocation18], 128, 128, 8
    $region89: #{tpu_custom_call.1} parent=1 // pred_fallthru
      _
    // Predicated region
    $region90: #{tpu_custom_call.1} parent=1 // pred_check
      _
    $region91: #{tpu_custom_call.1} parent=1 // pred_check_branch
      %2274 = sbr.rel (0) target = $region93
    $region92: #{tpu_custom_call.1} parent=1 // pred_region
      %2275 = dma.done [#allocation4], 256
    $region93: #{tpu_custom_call.1} parent=1 // pred_fallthru
      _
    // Predicated region
    $region94: #{tpu_custom_call.1} parent=1 // pred_check
      _
    $region95: #{tpu_custom_call.1} parent=1 // pred_check_branch
      %2277 = sbr.rel (0) target = $region97
    $region96: #{tpu_custom_call.1} parent=1 // pred_region
      %2278 = dma.done [#allocation18], 256
    $region97: #{tpu_custom_call.1} parent=1 // pred_fallthru
      _
    %2279 = vsyncpa [#allocation3], 1
    %2280 = vsyncpa [#allocation6], 1
    %2281 = vsyncpa [#allocation9], 1
    %2282 = vsyncpa [#allocation12], 1
    %2283 = vsyncpa [#allocation15], 1
    %2284 = vsyncpa [#allocation4], 1
    %2285 = vsyncpa [#allocation18], 1

</llo_original>
